<compile_context>
chip_gen: v5e
topology: v5e:2x2
jax: 0.10.0
libtpu: 0.0.40
codegen_flags: <defaults>
</compile_context>

<pallas_src>
import functools

import jax
import jax.numpy as jnp
from jax.experimental import pallas as pl
from jax.experimental.pallas import tpu as pltpu


def _round_up(x, m):
    return ((x + m - 1) // m) * m


# --------------------------------------------------------------------------
# Kernel 1: fc_in + classifier projection, tiled over node rows.
#   xh = x @ W_in + b_in            (f32, exact -> contrastive/discr target)
#   xw = bf16(xh) @ bf16(W_c)       (f32 acc, stored bf16, padded class lanes)
#   xw[:, -1] = 1.0                 (ones column -> degree via the adj matmul)
# --------------------------------------------------------------------------
def _fcin_kernel(x_ref, w_in_ref, b_in_ref, w_c_ref, xh_ref, xw_ref):
    xh = jnp.dot(x_ref[...], w_in_ref[...],
                 preferred_element_type=jnp.float32) + b_in_ref[...]
    xh_ref[...] = xh

    xw = jnp.dot(xh.astype(jnp.bfloat16), w_c_ref[...],
                 preferred_element_type=jnp.float32)
    col = jax.lax.broadcasted_iota(jnp.int32, xw.shape, 1)
    xw = jnp.where(col == xw.shape[1] - 1, 1.0, xw)
    xw_ref[...] = xw.astype(jnp.bfloat16)


# --------------------------------------------------------------------------
# Kernel 2: streaming aggregation over adj with fused degree.
#   grid = (row_tiles, k_tiles); out_ref (f32, block index constant over k)
#   is the accumulator (pl.when init/finalize).  adj is streamed in its
#   original dtype, tail k-columns masked in-kernel, cast to bf16 for the MXU.
#   xw is either VMEM-resident (sliced with pl.ds per k tile) or streamed.
#   Because xw's last lane is all ones, acc[:, -1] is the exact row degree.
# --------------------------------------------------------------------------
def _agg_kernel(adj_ref, xw_ref, b_c_ref, out_ref, *,
                n_nodes, tk, xw_resident, tail_mask):
    k = pl.program_id(1)

    @pl.when(k == 0)
    def _init():
        out_ref[...] = jnp.zeros_like(out_ref)

    a = adj_ref[...]
    if tail_mask:  # static: only emitted when N % tk != 0
        n_k = pl.num_programs(1)
        valid = jnp.where(k == n_k - 1, n_nodes - (n_k - 1) * tk, tk)
        col = jax.lax.broadcasted_iota(jnp.int32, a.shape, 1)
        a = jnp.where(col < valid, a, 0.0)   # zero OOB-garbage tail columns
    a = a.astype(jnp.bfloat16)               # 0/1 exact in bf16

    if xw_resident:  # static: whole xw slab lives in VMEM, slice the k stripe
        start = pl.multiple_of(k * tk, tk)
        xw = xw_ref[pl.ds(start, tk), :]
    else:
        xw = xw_ref[...]

    out_ref[...] += jnp.dot(a, xw, preferred_element_type=jnp.float32)

    @pl.when(k == pl.num_programs(1) - 1)
    def _finalize():
        acc = out_ref[...]
        deg = acc[:, -1:]                     # exact row degree
        res = acc / (deg + 1.0) + b_c_ref[...]   # exact divide (once/row tile)
        col = jax.lax.broadcasted_iota(jnp.int32, acc.shape, 1)
        out_ref[...] = jnp.where(col == acc.shape[1] - 1,
                                 jnp.broadcast_to(deg, acc.shape), res)


@functools.partial(jax.jit,
                   static_argnames=("tm", "tk", "tm1", "vmem_limit_bytes"))
def allgnn_forward(x, adj, w_in, b_in, w_c, b_c, *,
                   tm=512, tk=2048, tm1=1024,
                   vmem_limit_bytes=48 * 1024 * 1024):
    """Fused AllGNN forward. Returns (logits, features) like the torch module."""
    n, c_in = x.shape
    hidden = w_in.shape[1]
    n_classes = w_c.shape[1]

    c_pad = _round_up(n_classes + 1, 128)      # +1 lane reserved for the degree
    assert c_pad > n_classes, "degree lane would clash with class lanes"

    # Clamp tiles for small graphs (keep (8,128) divisibility of block shapes).
    tk_eff = min(tk, _round_up(n, 128))
    tm_eff = min(tm, _round_up(n, 8))
    n_k = pl.cdiv(n, tk_eff)
    n_xw_pad = n_k * tk_eff                    # xw rows cover every k stripe
    tm1_eff = min(tm1, n_xw_pad)

    # Only x (N x c_in, tiny) is padded in the wrapper; adj is NOT padded/cast.
    x_p = jnp.pad(x.astype(jnp.float32), ((0, n_xw_pad - n), (0, 0)))
    w_in_f = w_in.astype(jnp.float32)
    b_in_f = b_in.astype(jnp.float32).reshape(1, hidden)
    w_c_p = jnp.pad(w_c, ((0, 0), (0, c_pad - n_classes))).astype(jnp.bfloat16)
    b_c_p = jnp.pad(b_c.astype(jnp.float32),
                    (0, c_pad - n_classes)).reshape(1, c_pad)

    # ---- kernel 1: per-row-tile fc_in + projection --------------------------
    xh_p, xw_p = pl.pallas_call(
        _fcin_kernel,
        grid=(pl.cdiv(n_xw_pad, tm1_eff),),
        in_specs=[
            pl.BlockSpec((tm1_eff, c_in), lambda i: (i, 0)),
            pl.BlockSpec((c_in, hidden), lambda i: (0, 0)),
            pl.BlockSpec((1, hidden), lambda i: (0, 0)),
            pl.BlockSpec((hidden, c_pad), lambda i: (0, 0)),
        ],
        out_specs=(
            pl.BlockSpec((tm1_eff, hidden), lambda i: (i, 0)),   # no lane pad
            pl.BlockSpec((tm1_eff, c_pad), lambda i: (i, 0)),
        ),
        out_shape=(
            jax.ShapeDtypeStruct((n_xw_pad, hidden), jnp.float32),
            jax.ShapeDtypeStruct((n_xw_pad, c_pad), jnp.bfloat16),
        ),
        compiler_params=pltpu.CompilerParams(
            dimension_semantics=("parallel",),
            vmem_limit_bytes=vmem_limit_bytes),
    )(x_p, w_in_f, b_in_f, w_c_p)

    # ---- kernel 2: streamed adj aggregation + fused degree -------------------
    # Resident xw if its double-buffered bf16 footprint fits comfortably in
    # per-core VMEM (v7x has 64 MiB/TC); otherwise stream per k tile.
    xw_resident = (2 * n_xw_pad * c_pad * 2) <= 24 * 1024 * 1024
    if xw_resident:
        xw_spec = pl.BlockSpec((n_xw_pad, c_pad), lambda i, k: (0, 0))
    else:
        xw_spec = pl.BlockSpec((tk_eff, c_pad), lambda i, k: (k, 0))

    tail_mask = (n % tk_eff) != 0
    agg = functools.partial(_agg_kernel, n_nodes=n, tk=tk_eff,
                            xw_resident=xw_resident, tail_mask=tail_mask)

    out_p = pl.pallas_call(
        agg,
        grid=(pl.cdiv(n, tm_eff), n_k),
        in_specs=[
            pl.BlockSpec((tm_eff, tk_eff), lambda i, k: (i, k)),   # adj, raw dtype
            xw_spec,
            pl.BlockSpec((1, c_pad), lambda i, k: (0, 0)),
        ],
        out_specs=pl.BlockSpec((tm_eff, c_pad), lambda i, k: (i, 0)),
        out_shape=jax.ShapeDtypeStruct((n, c_pad), jnp.float32),
        compiler_params=pltpu.CompilerParams(
            dimension_semantics=("parallel", "arbitrary"),
            vmem_limit_bytes=vmem_limit_bytes),
    )(adj, xw_p, b_c_p)

    logits = out_p[:, :n_classes]
    degree = out_p[:, c_pad - 1:c_pad]
    x_hidden = xh_p[:n, :]

    # regularization_target is a compile-time zeros constant: let XLA
    # materialize it instead of wasting kernel VMEM / HBM writeback.
    reg_target = jnp.zeros((n, hidden), jnp.float32)

    # TODO(synk): node_generator / low_degree_updater branches (create_dummy_adj,
    # add_edges) are data-dependent graph rewiring with no fixed-shape Pallas
    # equivalent; they are disabled (None defaults), and the classifier's
    # idx/edge/head kwargs are unused by this simple GCN classifier.
    features = {
        'contrastive_target': [x_hidden, x_hidden],  # [1] = classifier feat
        'regularization_target': reg_target,
        'discr_target': x_hidden,
        'degree': degree,
    }
    return logits, features


def _init_params(key, in_channels, hidden_channels, n_classes):
    k1, k2, k3, k4 = jax.random.split(key, 4)
    w_in = jax.random.normal(k1, (in_channels, hidden_channels), jnp.float32) * 0.1
    b_in = jax.random.normal(k2, (hidden_channels,), jnp.float32) * 0.01
    w_c = jax.random.normal(k3, (hidden_channels, n_classes), jnp.float32) * 0.1
    b_c = jax.random.normal(k4, (n_classes,), jnp.float32) * 0.01
    return w_in, b_in, w_c, b_c


if __name__ == "__main__":
    N = 300           # number of graph nodes (ragged vs. every tile size)
    IN_CH = 8         # in_channels
    HIDDEN = 32       # hidden_channels
    N_CLASSES = 4

    key = jax.random.PRNGKey(0)
    kx, kadj, kp = jax.random.split(key, 3)

    x = jax.random.normal(kx, (N, IN_CH), jnp.float32)
    # symmetric binary adjacency with self-loops removed
    a = (jax.random.uniform(kadj, (N, N)) < 0.05).astype(jnp.float32)
    adj = jnp.clip(a + a.T, 0.0, 1.0) * (1.0 - jnp.eye(N, dtype=jnp.float32))

    w_in, b_in, w_c, b_c = _init_params(kp, IN_CH, HIDDEN, N_CLASSES)

    # plain-JAX reference (full precision)
    with jax.default_matmul_precision('highest'):
        xh_ref = x @ w_in + b_in
        deg_ref = adj.sum(axis=1, keepdims=True)
        logits_ref = (adj @ (xh_ref @ w_c)) / (deg_ref + 1.0) + b_c

    # (a) small tiles: exercises multi-tile row/K grid, tail masking and the
    #     resident-xw pl.ds slicing;  (b) defaults: exercises the clamp path.
    for tiles in (dict(tm=128, tk=128, tm1=128), dict()):
        logits, features = allgnn_forward(x, adj, w_in, b_in, w_c, b_c, **tiles)
        jax.block_until_ready(logits)
        jax.block_until_ready(features['degree'])

        assert jnp.allclose(features['contrastive_target'][0], xh_ref,
                            atol=1e-2, rtol=1e-2), "x_hidden mismatch"
        assert jnp.allclose(features['degree'], deg_ref, atol=1e-3), \
            "degree mismatch"
        # bf16 adjacency / projection operands on the MXU => loosened tolerance
        assert jnp.allclose(logits, logits_ref, atol=1e-2, rtol=2e-2), \
            "logits mismatch"
        assert jnp.all(features['regularization_target'] == 0.0)

    print("KERNEL_OK")
</pallas_src>

<mosaic_0001>
module attributes {stable_mosaic.version = 11 : i64} {
  func.func @_fcin_kernel(%arg0: i32, %arg1: memref<128x8xf32, #tpu.memory_space<vmem>>, %arg2: memref<8x32xf32, #tpu.memory_space<vmem>>, %arg3: memref<1x32xf32, #tpu.memory_space<vmem>>, %arg4: memref<32x128xbf16, #tpu.memory_space<vmem>>, %arg5: memref<128x32xf32, #tpu.memory_space<vmem>>, %arg6: memref<128x128xbf16, #tpu.memory_space<vmem>>) attributes {dimension_semantics = [#tpu.dimension_semantics<parallel>], iteration_bounds = array<i64: 3>, scalar_prefetch = 0 : i64, scratch_operands = 0 : i64, tpu.core_type = #tpu.core_type<tc>, window_params = [{transform_indices = @transform_0, window_bounds = array<i64: 128, 8>}, {pipeline_mode = #tpu.pipeline_mode<synchronous>, transform_indices = @transform_1, window_bounds = array<i64: 8, 32>}, {pipeline_mode = #tpu.pipeline_mode<synchronous>, transform_indices = @transform_2, window_bounds = array<i64: 1, 32>}, {pipeline_mode = #tpu.pipeline_mode<synchronous>, transform_indices = @transform_3, window_bounds = array<i64: 32, 128>}, {transform_indices = @transform_4, window_bounds = array<i64: 128, 32>}, {transform_indices = @transform_5, window_bounds = array<i64: 128, 128>}]} {
    %c0 = arith.constant 0 : index
    %c0_0 = arith.constant 0 : index
    %0 = vector.load %arg1[%c0, %c0_0] : memref<128x8xf32, #tpu.memory_space<vmem>>, vector<128x8xf32>
    %c0_1 = arith.constant 0 : index
    %c0_2 = arith.constant 0 : index
    %1 = vector.load %arg2[%c0_1, %c0_2] : memref<8x32xf32, #tpu.memory_space<vmem>>, vector<8x32xf32>
    %cst = arith.constant dense<0.000000e+00> : vector<128x32xf32>
    %2 = tpu.matmul %0, %1, %cst {dimension_numbers = #tpu.dot_dimension_numbers<[1], [0], [0], [1], [0, 0, 1, 1], [], []>} : vector<128x8xf32>, vector<8x32xf32>, vector<128x32xf32> -> vector<128x32xf32>
    %c0_3 = arith.constant 0 : index
    %c0_4 = arith.constant 0 : index
    %3 = vector.load %arg3[%c0_3, %c0_4] : memref<1x32xf32, #tpu.memory_space<vmem>>, vector<1x32xf32>
    %4 = vector.broadcast %3 : vector<1x32xf32> to vector<128x32xf32>
    %5 = arith.addf %2, %4 : vector<128x32xf32>
    %c0_5 = arith.constant 0 : index
    %c0_6 = arith.constant 0 : index
    %6 = vector.load %arg5[%c0_5, %c0_6] : memref<128x32xf32, #tpu.memory_space<vmem>>, vector<128x32xf32>
    tpu.vector_store %arg5[%c0_5, %c0_6], %5 {strides = array<i32>} : memref<128x32xf32, #tpu.memory_space<vmem>>, vector<128x32xf32>,
    %7 = arith.truncf %5 : vector<128x32xf32> to vector<128x32xbf16>
    %c0_7 = arith.constant 0 : index
    %c0_8 = arith.constant 0 : index
    %8 = vector.load %arg4[%c0_7, %c0_8] : memref<32x128xbf16, #tpu.memory_space<vmem>>, vector<32x128xbf16>
    %cst_9 = arith.constant dense<0.000000e+00> : vector<128x128xf32>
    %9 = tpu.matmul %7, %8, %cst_9 {dimension_numbers = #tpu.dot_dimension_numbers<[1], [0], [0], [1], [0, 0, 1, 1], [], []>} : vector<128x32xbf16>, vector<32x128xbf16>, vector<128x128xf32> -> vector<128x128xf32>
    %10 = tpu.iota {dimensions = array<i32: 1>} : vector<128x128xi32>
    %c127_i32 = arith.constant 127 : i32
    %11 = vector.broadcast %c127_i32 : i32 to vector<128x128xi32>
    %12 = arith.cmpi eq, %10, %11 : vector<128x128xi32>
    %cst_10 = arith.constant 1.000000e+00 : f32
    %13 = vector.broadcast %cst_10 : f32 to vector<128x128xf32>
    %14 = arith.select %12, %13, %9 : vector<128x128xi1>, vector<128x128xf32>
    %15 = arith.truncf %14 : vector<128x128xf32> to vector<128x128xbf16>
    %c0_11 = arith.constant 0 : index
    %c0_12 = arith.constant 0 : index
    %16 = vector.load %arg6[%c0_11, %c0_12] : memref<128x128xbf16, #tpu.memory_space<vmem>>, vector<128x128xbf16>
    tpu.vector_store %arg6[%c0_11, %c0_12], %15 {strides = array<i32>} : memref<128x128xbf16, #tpu.memory_space<vmem>>, vector<128x128xbf16>,
    return
  }
  func.func @transform_0(%arg0: i32) -> (i32, i32) {
    %c0_i32 = arith.constant 0 : i32
    %c0_i32_0 = arith.constant 0 : i32
    return %arg0, %c0_i32 : i32, i32
  }
  func.func @transform_1(%arg0: i32) -> (i32, i32) {
    %c0_i32 = arith.constant 0 : i32
    %c0_i32_0 = arith.constant 0 : i32
    %c0_i32_1 = arith.constant 0 : i32
    return %c0_i32, %c0_i32_0 : i32, i32
  }
  func.func @transform_2(%arg0: i32) -> (i32, i32) {
    %c0_i32 = arith.constant 0 : i32
    %c0_i32_0 = arith.constant 0 : i32
    %c0_i32_1 = arith.constant 0 : i32
    return %c0_i32, %c0_i32_0 : i32, i32
  }
  func.func @transform_3(%arg0: i32) -> (i32, i32) {
    %c0_i32 = arith.constant 0 : i32
    %c0_i32_0 = arith.constant 0 : i32
    %c0_i32_1 = arith.constant 0 : i32
    return %c0_i32, %c0_i32_0 : i32, i32
  }
  func.func @transform_4(%arg0: i32) -> (i32, i32) {
    %c0_i32 = arith.constant 0 : i32
    %c0_i32_0 = arith.constant 0 : i32
    return %arg0, %c0_i32 : i32, i32
  }
  func.func @transform_5(%arg0: i32) -> (i32, i32) {
    %c0_i32 = arith.constant 0 : i32
    %c0_i32_0 = arith.constant 0 : i32
    return %arg0, %c0_i32 : i32, i32
  }
}

module attributes {stable_mosaic.version = 11 : i64} {
  func.func @_agg_kernel(%arg0: i32, %arg1: i32, %arg2: memref<128x128xf32, #tpu.memory_space<vmem>>, %arg3: memref<384x128xbf16, #tpu.memory_space<vmem>>, %arg4: memref<1x128xf32, #tpu.memory_space<vmem>>, %arg5: memref<128x128xf32, #tpu.memory_space<vmem>>) attributes {dimension_semantics = [#tpu.dimension_semantics<parallel>, #tpu.dimension_semantics<arbitrary>], iteration_bounds = array<i64: 3, 3>, scalar_prefetch = 0 : i64, scratch_operands = 0 : i64, tpu.core_type = #tpu.core_type<tc>, window_params = [{transform_indices = @transform_0, window_bounds = array<i64: 128, 128>}, {pipeline_mode = #tpu.pipeline_mode<synchronous>, transform_indices = @transform_1, window_bounds = array<i64: 384, 128>}, {pipeline_mode = #tpu.pipeline_mode<synchronous>, transform_indices = @transform_2, window_bounds = array<i64: 1, 128>}, {transform_indices = @transform_3, window_bounds = array<i64: 128, 128>}]} {
    %c0_i32 = arith.constant 0 : i32
    %0 = arith.cmpi eq, %arg1, %c0_i32 : i32
    %1 = arith.extui %0 : i1 to i32
    %c0_i32_0 = arith.constant 0 : i32
    %2 = arith.cmpi ne, %1, %c0_i32_0 : i32
    scf.if %2 {
      %cst_11 = arith.constant 0.000000e+00 : f32
      %23 = vector.broadcast %cst_11 : f32 to vector<128x128xf32>
      %c0_12 = arith.constant 0 : index
      %c0_13 = arith.constant 0 : index
      %24 = vector.load %arg5[%c0_12, %c0_13] : memref<128x128xf32, #tpu.memory_space<vmem>>, vector<128x128xf32>
      tpu.vector_store %arg5[%c0_12, %c0_13], %23 {strides = array<i32>} : memref<128x128xf32, #tpu.memory_space<vmem>>, vector<128x128xf32>,
    } else {
    }
    %c0 = arith.constant 0 : index
    %c0_1 = arith.constant 0 : index
    %3 = vector.load %arg2[%c0, %c0_1] : memref<128x128xf32, #tpu.memory_space<vmem>>, vector<128x128xf32>
    %c2_i32 = arith.constant 2 : i32
    %4 = arith.cmpi eq, %arg1, %c2_i32 : i32
    %c44_i32 = arith.constant 44 : i32
    %c128_i32 = arith.constant 128 : i32
    %5 = arith.select %4, %c44_i32, %c128_i32 : i32
    %6 = tpu.iota {dimensions = array<i32: 1>} : vector<128x128xi32>
    %7 = vector.broadcast %5 : i32 to vector<128x128xi32>
    %8 = arith.cmpi slt, %6, %7 : vector<128x128xi32>
    %cst = arith.constant 0.000000e+00 : f32
    %9 = vector.broadcast %cst : f32 to vector<128x128xf32>
    %10 = arith.select %8, %3, %9 : vector<128x128xi1>, vector<128x128xf32>
    %11 = arith.truncf %10 : vector<128x128xf32> to vector<128x128xbf16>
    %c128_i32_2 = arith.constant 128 : i32
    %12 = arith.muli %arg1, %c128_i32_2 : i32
    %13 = tpu.assume_multiple %12, 128 : i32
    %14 = arith.index_cast %13 : i32 to index
    %c0_3 = arith.constant 0 : index
    %15 = vector.load %arg3[%14, %c0_3] : memref<384x128xbf16, #tpu.memory_space<vmem>>, vector<128x128xbf16>
    %c0_4 = arith.constant 0 : index
    %c0_5 = arith.constant 0 : index
    %16 = vector.load %arg5[%c0_4, %c0_5] : memref<128x128xf32, #tpu.memory_space<vmem>>, vector<128x128xf32>
    %cst_6 = arith.constant dense<0.000000e+00> : vector<128x128xf32>
    %17 = tpu.matmul %11, %15, %cst_6 {dimension_numbers = #tpu.dot_dimension_numbers<[1], [0], [0], [1], [0, 0, 1, 1], [], []>} : vector<128x128xbf16>, vector<128x128xbf16>, vector<128x128xf32> -> vector<128x128xf32>
    %18 = arith.addf %16, %17 : vector<128x128xf32>
    %c0_7 = arith.constant 0 : index
    %c0_8 = arith.constant 0 : index
    %19 = vector.load %arg5[%c0_7, %c0_8] : memref<128x128xf32, #tpu.memory_space<vmem>>, vector<128x128xf32>
    tpu.vector_store %arg5[%c0_7, %c0_8], %18 {strides = array<i32>} : memref<128x128xf32, #tpu.memory_space<vmem>>, vector<128x128xf32>,
    %c2_i32_9 = arith.constant 2 : i32
    %20 = arith.cmpi eq, %arg1, %c2_i32_9 : i32
    %21 = arith.extui %20 : i1 to i32
    %c0_i32_10 = arith.constant 0 : i32
    %22 = arith.cmpi ne, %21, %c0_i32_10 : i32
    scf.if %22 {
      %c0_11 = arith.constant 0 : index
      %c0_12 = arith.constant 0 : index
      %23 = vector.load %arg5[%c0_11, %c0_12] : memref<128x128xf32, #tpu.memory_space<vmem>>, vector<128x128xf32>
      %24 = vector.extract_strided_slice %23 {offsets = [0, 127], sizes = [128, 1], strides = [1, 1]} : vector<128x128xf32> to vector<128x1xf32>
      %cst_13 = arith.constant 1.000000e+00 : f32
      %25 = vector.broadcast %cst_13 : f32 to vector<128x1xf32>
      %26 = arith.addf %24, %25 : vector<128x1xf32>
      %27 = vector.broadcast %26 : vector<128x1xf32> to vector<128x128xf32>
      %28 = arith.divf %23, %27 : vector<128x128xf32>
      %c0_14 = arith.constant 0 : index
      %c0_15 = arith.constant 0 : index
      %29 = vector.load %arg4[%c0_14, %c0_15] : memref<1x128xf32, #tpu.memory_space<vmem>>, vector<1x128xf32>
      %30 = vector.broadcast %29 : vector<1x128xf32> to vector<128x128xf32>
      %31 = arith.addf %28, %30 : vector<128x128xf32>
      %32 = tpu.iota {dimensions = array<i32: 1>} : vector<128x128xi32>
      %c127_i32 = arith.constant 127 : i32
      %33 = vector.broadcast %c127_i32 : i32 to vector<128x128xi32>
      %34 = arith.cmpi eq, %32, %33 : vector<128x128xi32>
      %35 = vector.shape_cast %24 : vector<128x1xf32> to vector<128x1xf32>
      %36 = vector.broadcast %35 : vector<128x1xf32> to vector<128x128xf32>
      %37 = arith.select %34, %36, %31 : vector<128x128xi1>, vector<128x128xf32>
      %c0_16 = arith.constant 0 : index
      %c0_17 = arith.constant 0 : index
      %38 = vector.load %arg5[%c0_16, %c0_17] : memref<128x128xf32, #tpu.memory_space<vmem>>, vector<128x128xf32>
      tpu.vector_store %arg5[%c0_16, %c0_17], %37 {strides = array<i32>} : memref<128x128xf32, #tpu.memory_space<vmem>>, vector<128x128xf32>,
    } else {
    }
    return
  }
  func.func @transform_0(%arg0: i32, %arg1: i32) -> (i32, i32) {
    %c0_i32 = arith.constant 0 : i32
    return %arg0, %arg1 : i32, i32
  }
  func.func @transform_1(%arg0: i32, %arg1: i32) -> (i32, i32) {
    %c0_i32 = arith.constant 0 : i32
    %c0_i32_0 = arith.constant 0 : i32
    %c0_i32_1 = arith.constant 0 : i32
    return %c0_i32, %c0_i32_0 : i32, i32
  }
  func.func @transform_2(%arg0: i32, %arg1: i32) -> (i32, i32) {
    %c0_i32 = arith.constant 0 : i32
    %c0_i32_0 = arith.constant 0 : i32
    %c0_i32_1 = arith.constant 0 : i32
    return %c0_i32, %c0_i32_0 : i32, i32
  }
  func.func @transform_3(%arg0: i32, %arg1: i32) -> (i32, i32) {
    %c0_i32 = arith.constant 0 : i32
    %c0_i32_0 = arith.constant 0 : i32
    return %arg0, %c0_i32 : i32, i32
  }
}

</mosaic_0001>

<llo_original>
// kernel: allgnn_forward.2
$region0: #{allgnn_forward.2}
  #allocation0 [shape = 'u32[]', space=smem, size = 0x4, offset = 0x4, fixed_abs, tag = 'smem constant byte address 0x4 - core index']
  #allocation1 [shape = 'u32[72,128]{1,0:T(1,128)}', space=vmem, size = 0x9000, scoped, tag = 'internal scratch']
  %s0 = inlined_call_operand.vmem [shape: f32[384,8], index: 0, kind: input, shape index: {}]
  %s1 = inlined_call_operand.vmem [shape: f32[8,32], index: 1, kind: input, shape index: {}]
  %s2 = inlined_call_operand.vmem [shape: f32[1,32], index: 2, kind: input, shape index: {}]
  %s3 = inlined_call_operand.vmem [shape: bf16[32,128], index: 3, kind: input, shape index: {}]
  %s4 = inlined_call_operand.vmem [shape: f32[384,32], index: 4, kind: output, shape index: {0}]
  %s5 = inlined_call_operand.vmem [shape: bf16[384,128], index: 5, kind: output, shape index: {1}]
  %6 = xla_tuple %s4, %s5
  %s7 = sld [smem:[#allocation0]]
  $region57: #{allgnn_forward.2} parent=0
    _
  %s9 = ssub.s32 1, %s7
  %s10 = scalar_select 0, %s9, %s7
  loop: start=0, step=1, limit=5
  $region2: #{allgnn_forward.2} parent=0 // loop_pre_header
    _
  $region3: #{allgnn_forward.2} parent=0 // loop_header
    %s12 = sphi 0, %s16
    %p13 = scmp.ge.s32.totalorder %s12, 5
    %s22 = sphi 0, %s24
    %s25 = sphi 0, %s22
    %s26 = sphi 0, %s25
    %s42 = sphi 0, %s26
    %s46 = sphi 0, %s46
    %s48 = sphi 0, %s46
    %s49 = sphi 0, %s48
    %s63 = sphi 0, %s49
    %s67 = sphi 0, %s67
    %s69 = sphi 0, %s67
    %s70 = sphi 0, %s69
    %s84 = sphi 0, %s70
    %s88 = sphi 0, %s88
    %s90 = sphi 0, %s88
    %s91 = sphi 0, %s90
    %s105 = sphi 0, %s91
    %s111 = sphi 0, %s113
    %s114 = sphi 0, %s111
    %s115 = sphi 0, %s114
    %s131 = sphi 0, %s115
    %s137 = sphi 0, %s139
    %s140 = sphi 0, %s137
    %s141 = sphi 0, %s140
    %s157 = sphi 0, %s141
  $region4: #{allgnn_forward.2} parent=0 // loop_header_branch
    %15 = sbr.rel (%p13) target = $region8
  $region5: #{allgnn_forward.2} parent=0 // loop_body
    %s17 = ssub.s32 %s12, 1
    %s18 = ssub.s32 %s12, 2
    %s19 = sadd.s32 %s12, 1
    %s20 = ssub.s32 %s12, %s19
    %p21 = scmp.eq.s32.totalorder %s20, 0
    %s23 = sadd.s32 %s22, 1
    %s24 = scalar_select %p21, %s22, %s23
    %p27 = pneg %p21
    %p28 = scmp.eq.s32.totalorder %s12, 2
    %p29 = por %p27, %p28
    %p30 = scmp.ne.s32.totalorder %s22, %s25
    %p31 = scmp.eq.s32.totalorder %s12, 0
    %p32 = por %p30, %p31
    %p33 = scmp.ne.s32.totalorder %s22, %s25
    %p34 = scmp.eq.s32.totalorder %s17, 2
    %p35 = por %p33, %p34
    %p36 = scmp.ne.s32.totalorder %s25, %s26
    %p37 = scmp.eq.s32.totalorder %s17, 0
    %p38 = por %p36, %p37
    %p39 = scmp.ne.s32.totalorder %s25, %s26
    %p40 = scmp.eq.s32.totalorder %s18, 2
    %p41 = por %p39, %p40
    %p43 = scmp.ne.s32.totalorder %s26, %s42
    %p44 = scmp.eq.s32.totalorder %s18, 0
    %p45 = por %p43, %p44
    %s47 = sadd.s32 %s46, 1
    %p50 = scmp.eq.s32.totalorder %s12, 2
    %p51 = scmp.ne.s32.totalorder %s46, %s48
    %p52 = scmp.eq.s32.totalorder %s12, 0
    %p53 = por %p51, %p52
    %p54 = scmp.ne.s32.totalorder %s46, %s48
    %p55 = scmp.eq.s32.totalorder %s17, 2
    %p56 = por %p54, %p55
    %p57 = scmp.ne.s32.totalorder %s48, %s49
    %p58 = scmp.eq.s32.totalorder %s17, 0
    %p59 = por %p57, %p58
    %p60 = scmp.ne.s32.totalorder %s48, %s49
    %p61 = scmp.eq.s32.totalorder %s18, 2
    %p62 = por %p60, %p61
    %p64 = scmp.ne.s32.totalorder %s49, %s63
    %p65 = scmp.eq.s32.totalorder %s18, 0
    %p66 = por %p64, %p65
    %s68 = sadd.s32 %s67, 1
    %p71 = scmp.eq.s32.totalorder %s12, 2
    %p72 = scmp.ne.s32.totalorder %s67, %s69
    %p73 = scmp.eq.s32.totalorder %s12, 0
    %p74 = por %p72, %p73
    %p75 = scmp.ne.s32.totalorder %s67, %s69
    %p76 = scmp.eq.s32.totalorder %s17, 2
    %p77 = por %p75, %p76
    %p78 = scmp.ne.s32.totalorder %s69, %s70
    %p79 = scmp.eq.s32.totalorder %s17, 0
    %p80 = por %p78, %p79
    %p81 = scmp.ne.s32.totalorder %s69, %s70
    %p82 = scmp.eq.s32.totalorder %s18, 2
    %p83 = por %p81, %p82
    %p85 = scmp.ne.s32.totalorder %s70, %s84
    %p86 = scmp.eq.s32.totalorder %s18, 0
    %p87 = por %p85, %p86
    %s89 = sadd.s32 %s88, 1
    %p92 = scmp.eq.s32.totalorder %s12, 2
    %p93 = scmp.ne.s32.totalorder %s88, %s90
    %p94 = scmp.eq.s32.totalorder %s12, 0
    %p95 = por %p93, %p94
    %p96 = scmp.ne.s32.totalorder %s88, %s90
    %p97 = scmp.eq.s32.totalorder %s17, 2
    %p98 = por %p96, %p97
    %p99 = scmp.ne.s32.totalorder %s90, %s91
    %p100 = scmp.eq.s32.totalorder %s17, 0
    %p101 = por %p99, %p100
    %p102 = scmp.ne.s32.totalorder %s90, %s91
    %p103 = scmp.eq.s32.totalorder %s18, 2
    %p104 = por %p102, %p103
    %p106 = scmp.ne.s32.totalorder %s91, %s105
    %p107 = scmp.eq.s32.totalorder %s18, 0
    %p108 = por %p106, %p107
    %s109 = ssub.s32 %s12, %s19
    %p110 = scmp.eq.s32.totalorder %s109, 0
    %s112 = sadd.s32 %s111, 1
    %s113 = scalar_select %p110, %s111, %s112
    %p116 = pneg %p110
    %p117 = scmp.eq.s32.totalorder %s12, 2
    %p118 = por %p116, %p117
    %p119 = scmp.ne.s32.totalorder %s111, %s114
    %p120 = scmp.eq.s32.totalorder %s12, 0
    %p121 = por %p119, %p120
    %p122 = scmp.ne.s32.totalorder %s111, %s114
    %p123 = scmp.eq.s32.totalorder %s17, 2
    %p124 = por %p122, %p123
    %p125 = scmp.ne.s32.totalorder %s114, %s115
    %p126 = scmp.eq.s32.totalorder %s17, 0
    %p127 = por %p125, %p126
    %p128 = scmp.ne.s32.totalorder %s114, %s115
    %p129 = scmp.eq.s32.totalorder %s18, 2
    %p130 = por %p128, %p129
    %p132 = scmp.ne.s32.totalorder %s115, %s131
    %p133 = scmp.eq.s32.totalorder %s18, 0
    %p134 = por %p132, %p133
    %s135 = ssub.s32 %s12, %s19
    %p136 = scmp.eq.s32.totalorder %s135, 0
    %s138 = sadd.s32 %s137, 1
    %s139 = scalar_select %p136, %s137, %s138
    %p142 = pneg %p136
    %p143 = scmp.eq.s32.totalorder %s12, 2
    %p144 = por %p142, %p143
    %p145 = scmp.ne.s32.totalorder %s137, %s140
    %p146 = scmp.eq.s32.totalorder %s12, 0
    %p147 = por %p145, %p146
    %p148 = scmp.ne.s32.totalorder %s137, %s140
    %p149 = scmp.eq.s32.totalorder %s17, 2
    %p150 = por %p148, %p149
    %p151 = scmp.ne.s32.totalorder %s140, %s141
    %p152 = scmp.eq.s32.totalorder %s17, 0
    %p153 = por %p151, %p152
    %p154 = scmp.ne.s32.totalorder %s140, %s141
    %p155 = scmp.eq.s32.totalorder %s18, 2
    %p156 = por %p154, %p155
    %p158 = scmp.ne.s32.totalorder %s141, %s157
    %p159 = scmp.eq.s32.totalorder %s18, 0
    %p160 = por %p158, %p159
    %p161 = scmp.le.s32.totalorder 1, %s12
    %p162 = scmp.lt.s32.totalorder %s12, 4
    %p163 = pnand %p161, %p162
    %p164 = pneg %p163
    // Predicated region
    $region9: #{allgnn_forward.2} parent=5 // pred_check
      _
    $region10: #{allgnn_forward.2} parent=5 // pred_check_branch
      %166 = sbr.rel (%p163) target = $region12
    $region11: #{allgnn_forward.2} parent=5 // pred_region
      %s167 = ssub.s32 %s12, 1
      // Predicated region
      $region13: #{allgnn_forward.2} parent=11 // pred_check
        %p168 = pneg %p59
      $region14: #{allgnn_forward.2} parent=11 // pred_check_branch
        %170 = sbr.rel (%p168) target = $region16
      $region15: #{allgnn_forward.2} parent=11 // pred_region
        _
      $region16: #{allgnn_forward.2} parent=11 // pred_fallthru
        _
      // Predicated region
      $region17: #{allgnn_forward.2} parent=11 // pred_check
        %p171 = pneg %p80
      $region18: #{allgnn_forward.2} parent=11 // pred_check_branch
        %173 = sbr.rel (%p171) target = $region20
      $region19: #{allgnn_forward.2} parent=11 // pred_region
        _
      $region20: #{allgnn_forward.2} parent=11 // pred_fallthru
        _
      // Predicated region
      $region21: #{allgnn_forward.2} parent=11 // pred_check
        %p174 = pneg %p101
      $region22: #{allgnn_forward.2} parent=11 // pred_check_branch
        %176 = sbr.rel (%p174) target = $region24
      $region23: #{allgnn_forward.2} parent=11 // pred_region
        _
      $region24: #{allgnn_forward.2} parent=11 // pred_fallthru
        _
    $region12: #{allgnn_forward.2} parent=5 // pred_fallthru
      _
    %p177 = scmp.lt.s32.totalorder %s12, 3
    // Predicated region
    $region25: #{allgnn_forward.2} parent=5 // pred_check
      %p178 = pneg %p177
    $region26: #{allgnn_forward.2} parent=5 // pred_check_branch
      %180 = sbr.rel (%p178) target = $region28
    $region27: #{allgnn_forward.2} parent=5 // pred_region
      // Predicated region
      $region29: #{allgnn_forward.2} parent=27 // pred_check
        %p181 = pneg %p32
      $region30: #{allgnn_forward.2} parent=27 // pred_check_branch
        %183 = sbr.rel (%p181) target = $region32
      $region31: #{allgnn_forward.2} parent=27 // pred_region
        %s184 = smul.u32 16, %s12
        %p185 = scmp.lt.s32.totalorder %s184, 47
        %s186 = scalar_select %p185, %s184, 47
        %s187 = smul.addr %s186, 8
        %s188 = scalar_lea.vmem %s0, %s187
        %s189 = smul.u32 16, %s12
      $region32: #{allgnn_forward.2} parent=27 // pred_fallthru
        _
    $region28: #{allgnn_forward.2} parent=5 // pred_fallthru
      _
    %p190 = scmp.le.s32.totalorder 1, %s12
    %p191 = scmp.lt.s32.totalorder %s12, 4
    %p192 = pnand %p190, %p191
    %p193 = pneg %p192
    // Predicated region
    $region33: #{allgnn_forward.2} parent=5 // pred_check
      _
    $region34: #{allgnn_forward.2} parent=5 // pred_check_branch
      %195 = sbr.rel (%p192) target = $region36
    $region35: #{allgnn_forward.2} parent=5 // pred_region
      %s196 = ssub.s32 %s12, 1
      %s197 = smul.u32 16, %s17
      %p198 = scmp.lt.s32.totalorder %s197, 47
      %s199 = scalar_select %p198, %s197, 47
      %s200 = smul.addr %s199, 8
      %s201 = scalar_lea.vmem %s0, %s200
      %p202 = pneg %p38
      %p203 = pneg %p35
      %p204 = pneg %p59
      %p205 = pneg %p56
      %p206 = pneg %p80
      %p207 = pneg %p77
      %p208 = pneg %p101
      %p209 = pneg %p98
      %p210 = pneg %p127
      %p211 = pneg %p124
      %s212 = smul.u32 16, %s17
      %p213 = scmp.lt.s32.totalorder %s212, 47
      %s214 = scalar_select %p213, %s212, 47
      %s215 = smul.addr %s214, 8
      %s216 = scalar_lea.vmem %s4, %s215
      %p217 = pneg %p153
      %p218 = pneg %p150
      %s219 = smul.u32 16, %s17
      %p220 = scmp.lt.s32.totalorder %s219, 47
      %s221 = scalar_select %p220, %s219, 47
      %s222 = smul.addr %s221, 4
      %s223 = scalar_lea.vmem %s5, %s222
      %s224 = smul.u32 16, %s17
      %p225 = scmp.lt.s32.totalorder %s224, 47
      %s226 = scalar_select %p225, %s224, 47
      %s227 = smul.addr %s226, 8
      %s228 = scalar_lea.vmem %s0, %s227
      %s229 = smul.u32 16, %s17
      %s230 = smul.u32 16, %s17
      %p231 = scmp.lt.s32.totalorder %s230, 47
      %s232 = scalar_select %p231, %s230, 47
      %s233 = smul.addr %s232, 8
      %s234 = scalar_lea.vmem %s4, %s233
      %s235 = smul.u32 16, %s17
      %s236 = smul.u32 16, %s17
      %p237 = scmp.lt.s32.totalorder %s236, 47
      %s238 = scalar_select %p237, %s236, 47
      %s239 = smul.addr %s238, 4
      %s240 = scalar_lea.vmem %s5, %s239
      %s241 = smul.u32 16, %s17
      %v243 = vld [vmem:[%s228] sm:$0xff]
      %v244 = vld [vmem:[%s228 + $0x8] sm:$0xff]
      %v245 = vld [vmem:[%s228 + $0x10] sm:$0xff]
      %v246 = vld [vmem:[%s228 + $0x18] sm:$0xff]
      %v247 = vld [vmem:[%s228 + $0x20] sm:$0xff]
      %v248 = vld [vmem:[%s228 + $0x28] sm:$0xff]
      %v249 = vld [vmem:[%s228 + $0x30] sm:$0xff]
      %v250 = vld [vmem:[%s228 + $0x38] sm:$0xff]
      %v251 = vld [vmem:[%s228 + $0x40] sm:$0xff]
      %v252 = vld [vmem:[%s228 + $0x48] sm:$0xff]
      %v253 = vld [vmem:[%s228 + $0x50] sm:$0xff]
      %v254 = vld [vmem:[%s228 + $0x58] sm:$0xff]
      %v255 = vld [vmem:[%s228 + $0x60] sm:$0xff]
      %v256 = vld [vmem:[%s228 + $0x68] sm:$0xff]
      %v257 = vld [vmem:[%s228 + $0x70] sm:$0xff]
      %v258 = vld [vmem:[%s228 + $0x78] sm:$0xff]
      %v259 = vld [vmem:[%s1] sm:$0xff]
      %v260 = vld [vmem:[%s2] sm:$0x1]
      %v262 = vperm.slane %v260, 0
      %vm264 = vcmask 64512
      %v266 = vsel %vm264, %v243, 0
      %v269 = vsel %vm264, %v244, 0
      %v272 = vsel %vm264, %v245, 0
      %v275 = vsel %vm264, %v246, 0
      %v278 = vsel %vm264, %v247, 0
      %v281 = vsel %vm264, %v248, 0
      %v284 = vsel %vm264, %v249, 0
      %v287 = vsel %vm264, %v250, 0
      %v290 = vsel %vm264, %v251, 0
      %v293 = vsel %vm264, %v252, 0
      %v296 = vsel %vm264, %v253, 0
      %v299 = vsel %vm264, %v254, 0
      %v302 = vsel %vm264, %v255, 0
      %v305 = vsel %vm264, %v256, 0
      %v308 = vsel %vm264, %v257, 0
      %v311 = vsel %vm264, %v258, 0
      %313 = vmatpush.msra.mxu0 0.0
      %314 = vmatpush.msra.mxu0 0.0
      %315 = vmatpush.msra.mxu0 0.0
      %316 = vmatpush.msra.mxu0 0.0
      %317 = vmatpush.msra.mxu0 0.0
      %318 = vmatpush.msra.mxu0 0.0
      %319 = vmatpush.msra.mxu0 0.0
      %320 = vmatpush.msra.mxu0 0.0
      %321 = vmatpush.msra.mxu0 0.0
      %322 = vmatpush.msra.mxu0 0.0
      %323 = vmatpush.msra.mxu0 0.0
      %324 = vmatpush.msra.mxu0 0.0
      %325 = vmatpush.msra.mxu0 0.0
      %326 = vmatpush.msra.mxu0 0.0
      %327 = vmatpush.msra.mxu0 0.0
      %328 = vmatpush.msra.mxu0 %v259
      %329 = vmatmul.f32.gmra.mxu0 %v266
      %v330 = vpop.f32.mrf.mxu0
      %v331 = vadd.f32 %v262, %v330
      %332 = vmatmul.f32.gmra.mxu0 %v269
      %v333 = vpop.f32.mrf.mxu0
      %v334 = vadd.f32 %v262, %v333
      %335 = vmatmul.f32.gmra.mxu0 %v272
      %v336 = vpop.f32.mrf.mxu0
      %v337 = vadd.f32 %v262, %v336
      %338 = vmatmul.f32.gmra.mxu0 %v275
      %v339 = vpop.f32.mrf.mxu0
      %v340 = vadd.f32 %v262, %v339
      %341 = vmatmul.f32.gmra.mxu0 %v278
      %v342 = vpop.f32.mrf.mxu0
      %v343 = vadd.f32 %v262, %v342
      %344 = vmatmul.f32.gmra.mxu0 %v281
      %v345 = vpop.f32.mrf.mxu0
      %v346 = vadd.f32 %v262, %v345
      %347 = vmatmul.f32.gmra.mxu0 %v284
      %v348 = vpop.f32.mrf.mxu0
      %v349 = vadd.f32 %v262, %v348
      %350 = vmatmul.f32.gmra.mxu0 %v287
      %v351 = vpop.f32.mrf.mxu0
      %v352 = vadd.f32 %v262, %v351
      %353 = vmatmul.f32.gmra.mxu0 %v290
      %v354 = vpop.f32.mrf.mxu0
      %v355 = vadd.f32 %v262, %v354
      %356 = vmatmul.f32.gmra.mxu0 %v293
      %v357 = vpop.f32.mrf.mxu0
      %v358 = vadd.f32 %v262, %v357
      %359 = vmatmul.f32.gmra.mxu0 %v296
      %v360 = vpop.f32.mrf.mxu0
      %v361 = vadd.f32 %v262, %v360
      %362 = vmatmul.f32.gmra.mxu0 %v299
      %v363 = vpop.f32.mrf.mxu0
      %v364 = vadd.f32 %v262, %v363
      %365 = vmatmul.f32.gmra.mxu0 %v302
      %v366 = vpop.f32.mrf.mxu0
      %v367 = vadd.f32 %v262, %v366
      %368 = vmatmul.f32.gmra.mxu0 %v305
      %v369 = vpop.f32.mrf.mxu0
      %v370 = vadd.f32 %v262, %v369
      %371 = vmatmul.f32.gmra.mxu0 %v308
      %v372 = vpop.f32.mrf.mxu0
      %v373 = vadd.f32 %v262, %v372
      %374 = vmatmul.f32.gmra.mxu0 %v311
      %v375 = vpop.f32.mrf.mxu0
      %v376 = vadd.f32 %v262, %v375
      %377 = vdwg.mxu0
      %vm378 = vcmask 261120
      %379 = vst.msk [vmem:[%s234] sm:$0xff] %vm378, %v331
      %380 = vst.msk [vmem:[%s234 + $0x8] sm:$0xff] %vm378, %v334
      %381 = vst.msk [vmem:[%s234 + $0x10] sm:$0xff] %vm378, %v337
      %382 = vst.msk [vmem:[%s234 + $0x18] sm:$0xff] %vm378, %v340
      %383 = vst.msk [vmem:[%s234 + $0x20] sm:$0xff] %vm378, %v343
      %384 = vst.msk [vmem:[%s234 + $0x28] sm:$0xff] %vm378, %v346
      %385 = vst.msk [vmem:[%s234 + $0x30] sm:$0xff] %vm378, %v349
      %386 = vst.msk [vmem:[%s234 + $0x38] sm:$0xff] %vm378, %v352
      %387 = vst.msk [vmem:[%s234 + $0x40] sm:$0xff] %vm378, %v355
      %388 = vst.msk [vmem:[%s234 + $0x48] sm:$0xff] %vm378, %v358
      %389 = vst.msk [vmem:[%s234 + $0x50] sm:$0xff] %vm378, %v361
      %390 = vst.msk [vmem:[%s234 + $0x58] sm:$0xff] %vm378, %v364
      %391 = vst.msk [vmem:[%s234 + $0x60] sm:$0xff] %vm378, %v367
      %392 = vst.msk [vmem:[%s234 + $0x68] sm:$0xff] %vm378, %v370
      %393 = vst.msk [vmem:[%s234 + $0x70] sm:$0xff] %vm378, %v373
      %394 = vst.msk [vmem:[%s234 + $0x78] sm:$0xff] %vm378, %v376
      %v395 = vpack.c.bf16 %v334, %v331
      %v396 = vpack.c.bf16 %v340, %v337
      %v397 = vpack.c.bf16 %v346, %v343
      %v398 = vpack.c.bf16 %v352, %v349
      %v399 = vpack.c.bf16 %v358, %v355
      %v400 = vpack.c.bf16 %v364, %v361
      %v401 = vpack.c.bf16 %v370, %v367
      %v402 = vpack.c.bf16 %v376, %v373
      %v403 = vld [vmem:[%s3] sm:$0xf]
      %v404 = vld [vmem:[%s3 + $0x4] sm:$0xf]
      %v405 = vld [vmem:[%s3 + $0x8] sm:$0xf]
      %v406 = vld [vmem:[%s3 + $0xc] sm:$0xf]
      %v411 = vunpack.c.l.b16 %v403
      %v412 = vunpack.c.l.b16 %v404
      %v413 = vunpack.c.l.b16 %v405
      %v414 = vunpack.c.l.b16 %v406
      %v415 = vpack.c.b16 %v412, %v411
      %v416 = vpack.c.b16 %v414, %v413
      %v420 = vsel %vm378, %v395, 0
      %v423 = vsel %vm378, %v396, 0
      %v426 = vsel %vm378, %v397, 0
      %v429 = vsel %vm378, %v398, 0
      %v432 = vsel %vm378, %v399, 0
      %v435 = vsel %vm378, %v400, 0
      %v438 = vsel %vm378, %v401, 0
      %v441 = vsel %vm378, %v402, 0
      %443 = vmatpush.bf16.msra.mxu0 0
      %444 = vmatpush.bf16.msra.mxu0 0
      %445 = vmatpush.bf16.msra.mxu0 0
      %446 = vmatpush.bf16.msra.mxu0 0
      %447 = vmatpush.bf16.msra.mxu0 0
      %448 = vmatpush.bf16.msra.mxu0 0
      %449 = vmatpush.bf16.msra.mxu0 %v416
      %450 = vmatpush.bf16.msra.mxu0 %v415
      %451 = vmatmul.bf16.gmra.mxu0 %v420
      %v452 = vpop.f32.mrf.mxu0
      %v453 = vadd.f32 0.0, %v452
      %v454 = vpop.f32.mrf.mxu0
      %v455 = vadd.f32 0.0, %v454
      %456 = vmatmul.bf16.gmra.mxu0 %v423
      %v457 = vpop.f32.mrf.mxu0
      %v458 = vadd.f32 0.0, %v457
      %v459 = vpop.f32.mrf.mxu0
      %v460 = vadd.f32 0.0, %v459
      %461 = vmatmul.bf16.gmra.mxu0 %v426
      %v462 = vpop.f32.mrf.mxu0
      %v463 = vadd.f32 0.0, %v462
      %v464 = vpop.f32.mrf.mxu0
      %v465 = vadd.f32 0.0, %v464
      %466 = vmatmul.bf16.gmra.mxu0 %v429
      %v467 = vpop.f32.mrf.mxu0
      %v468 = vadd.f32 0.0, %v467
      %v469 = vpop.f32.mrf.mxu0
      %v470 = vadd.f32 0.0, %v469
      %471 = vmatmul.bf16.gmra.mxu0 %v432
      %v472 = vpop.f32.mrf.mxu0
      %v473 = vadd.f32 0.0, %v472
      %v474 = vpop.f32.mrf.mxu0
      %v475 = vadd.f32 0.0, %v474
      %476 = vmatmul.bf16.gmra.mxu0 %v435
      %v477 = vpop.f32.mrf.mxu0
      %v478 = vadd.f32 0.0, %v477
      %v479 = vpop.f32.mrf.mxu0
      %v480 = vadd.f32 0.0, %v479
      %481 = vmatmul.bf16.gmra.mxu0 %v438
      %v482 = vpop.f32.mrf.mxu0
      %v483 = vadd.f32 0.0, %v482
      %v484 = vpop.f32.mrf.mxu0
      %v485 = vadd.f32 0.0, %v484
      %486 = vmatmul.bf16.gmra.mxu0 %v441
      %v487 = vpop.f32.mrf.mxu0
      %v488 = vadd.f32 0.0, %v487
      %v489 = vpop.f32.mrf.mxu0
      %v490 = vadd.f32 0.0, %v489
      %491 = vdwg.mxu0
      %v492 = vlaneseq
      %v493 = vand.u32 %v492, 127
      %vm494 = vcmp.eq.s32.totalorder %v493, 127
      %v495 = vsel %vm494, 1.0, %v453
      %v496 = vsel %vm494, 1.0, %v455
      %v497 = vsel %vm494, 1.0, %v458
      %v498 = vsel %vm494, 1.0, %v460
      %v499 = vsel %vm494, 1.0, %v463
      %v500 = vsel %vm494, 1.0, %v465
      %v501 = vsel %vm494, 1.0, %v468
      %v502 = vsel %vm494, 1.0, %v470
      %v503 = vsel %vm494, 1.0, %v473
      %v504 = vsel %vm494, 1.0, %v475
      %v505 = vsel %vm494, 1.0, %v478
      %v506 = vsel %vm494, 1.0, %v480
      %v507 = vsel %vm494, 1.0, %v483
      %v508 = vsel %vm494, 1.0, %v485
      %v509 = vsel %vm494, 1.0, %v488
      %v510 = vsel %vm494, 1.0, %v490
      %v511 = vpack.c.bf16 %v495, %v495
      %v512 = vpack.c.bf16 %v496, %v496
      %v513 = vpack.c.bf16 %v497, %v497
      %v514 = vpack.c.bf16 %v498, %v498
      %v515 = vpack.c.bf16 %v499, %v499
      %v516 = vpack.c.bf16 %v500, %v500
      %v517 = vpack.c.bf16 %v501, %v501
      %v518 = vpack.c.bf16 %v502, %v502
      %v519 = vpack.c.bf16 %v503, %v503
      %v520 = vpack.c.bf16 %v504, %v504
      %v521 = vpack.c.bf16 %v505, %v505
      %v522 = vpack.c.bf16 %v506, %v506
      %v523 = vpack.c.bf16 %v507, %v507
      %v524 = vpack.c.bf16 %v508, %v508
      %v525 = vpack.c.bf16 %v509, %v509
      %v526 = vpack.c.bf16 %v510, %v510
      %527 = vst [vmem:[%s240] sm:$0xf] %v511
      %528 = vst [vmem:[%s240 + $0x4] sm:$0xf] %v512
      %529 = vst [vmem:[%s240 + $0x8] sm:$0xf] %v513
      %530 = vst [vmem:[%s240 + $0xc] sm:$0xf] %v514
      %531 = vst [vmem:[%s240 + $0x10] sm:$0xf] %v515
      %532 = vst [vmem:[%s240 + $0x14] sm:$0xf] %v516
      %533 = vst [vmem:[%s240 + $0x18] sm:$0xf] %v517
      %534 = vst [vmem:[%s240 + $0x1c] sm:$0xf] %v518
      %535 = vst [vmem:[%s240 + $0x20] sm:$0xf] %v519
      %536 = vst [vmem:[%s240 + $0x24] sm:$0xf] %v520
      %537 = vst [vmem:[%s240 + $0x28] sm:$0xf] %v521
      %538 = vst [vmem:[%s240 + $0x2c] sm:$0xf] %v522
      %539 = vst [vmem:[%s240 + $0x30] sm:$0xf] %v523
      %540 = vst [vmem:[%s240 + $0x34] sm:$0xf] %v524
      %541 = vst [vmem:[%s240 + $0x38] sm:$0xf] %v525
      %542 = vst [vmem:[%s240 + $0x3c] sm:$0xf] %v526
      %s543 = smul.u32 16, %s17
      %p544 = scmp.lt.s32.totalorder %s543, 47
      %s545 = scalar_select %p544, %s543, 47
      %s546 = smul.addr %s545, 8
      %s547 = scalar_lea.vmem %s4, %s546
      %s548 = smul.u32 16, %s17
      %p549 = scmp.lt.s32.totalorder %s548, 47
      %s550 = scalar_select %p549, %s548, 47
      %s551 = smul.addr %s550, 4
      %s552 = scalar_lea.vmem %s5, %s551
      // Predicated region
      $region37: #{allgnn_forward.2} parent=35 // pred_check
        %p553 = pneg %p124
      $region38: #{allgnn_forward.2} parent=35 // pred_check_branch
        %555 = sbr.rel (%p553) target = $region40
      $region39: #{allgnn_forward.2} parent=35 // pred_region
        %s556 = smul.u32 16, %s17
      $region40: #{allgnn_forward.2} parent=35 // pred_fallthru
        _
      // Predicated region
      $region41: #{allgnn_forward.2} parent=35 // pred_check
        %p557 = pneg %p150
      $region42: #{allgnn_forward.2} parent=35 // pred_check_branch
        %559 = sbr.rel (%p557) target = $region44
      $region43: #{allgnn_forward.2} parent=35 // pred_region
        %s560 = smul.u32 16, %s17
      $region44: #{allgnn_forward.2} parent=35 // pred_fallthru
        _
    $region36: #{allgnn_forward.2} parent=5 // pred_fallthru
      _
    %p561 = scmp.le.s32.totalorder 2, %s12
    // Predicated region
    $region45: #{allgnn_forward.2} parent=5 // pred_check
      %p562 = pneg %p561
    $region46: #{allgnn_forward.2} parent=5 // pred_check_branch
      %564 = sbr.rel (%p562) target = $region48
    $region47: #{allgnn_forward.2} parent=5 // pred_region
      %s565 = ssub.s32 %s12, 2
      // Predicated region
      $region49: #{allgnn_forward.2} parent=47 // pred_check
        %p566 = pneg %p130
      $region50: #{allgnn_forward.2} parent=47 // pred_check_branch
        %568 = sbr.rel (%p566) target = $region52
      $region51: #{allgnn_forward.2} parent=47 // pred_region
        %s569 = smul.u32 16, %s18
        %p570 = scmp.lt.s32.totalorder %s569, 47
        %s571 = scalar_select %p570, %s569, 47
        %s572 = smul.addr %s571, 8
        %s573 = scalar_lea.vmem %s4, %s572
      $region52: #{allgnn_forward.2} parent=47 // pred_fallthru
        _
      // Predicated region
      $region53: #{allgnn_forward.2} parent=47 // pred_check
        %p574 = pneg %p156
      $region54: #{allgnn_forward.2} parent=47 // pred_check_branch
        %576 = sbr.rel (%p574) target = $region56
      $region55: #{allgnn_forward.2} parent=47 // pred_region
        %s577 = smul.u32 16, %s18
        %p578 = scmp.lt.s32.totalorder %s577, 47
        %s579 = scalar_select %p578, %s577, 47
        %s580 = smul.addr %s579, 4
        %s581 = scalar_lea.vmem %s5, %s580
      $region56: #{allgnn_forward.2} parent=47 // pred_fallthru
        _
    $region48: #{allgnn_forward.2} parent=5 // pred_fallthru
      _
  $region6: #{allgnn_forward.2} parent=0 // loop_footer
    %s16 = sadd.s32 1, %s12
  $region7: #{allgnn_forward.2} parent=0 // loop_footer_branch
    %11 = sbr.rel target = $region3
  $region8: #{allgnn_forward.2} parent=0 // loop_exit
    _

// kernel: allgnn_forward.3
$region0: #{allgnn_forward.3}
  #allocation0 [shape = 'u32[]', space=smem, size = 0x4, offset = 0x4, fixed_abs, tag = 'smem constant byte address 0x4 - core index']
  #allocation1 [shape = 'u32[72,128]{1,0:T(1,128)}', space=vmem, size = 0x9000, scoped, tag = 'internal scratch']
  %s0 = inlined_call_operand.vmem [shape: f32[300,300], index: 0, kind: input, shape index: {}]
  %s1 = inlined_call_operand.vmem [shape: bf16[384,128], index: 1, kind: input, shape index: {}]
  %s2 = inlined_call_operand.vmem [shape: f32[1,128], index: 2, kind: input, shape index: {}]
  %s3 = inlined_call_operand.vmem [shape: f32[300,128], index: 3, kind: output, shape index: {}]
  %s4 = sld [smem:[#allocation0]]
  $region153: #{allgnn_forward.3} parent=0
    _
  %s6 = ssub.s32 1, %s4
  %s7 = scalar_select 0, %s6, %s4
  $region1: #{allgnn_forward.3} parent=0
    #allocation2 [shape = 'u8[131072]{0}', space=vmem, size = 0x20000, scoped, tag = 'input window, operand 0']
    #allocation3 [shape = 'u8[131072]{0}', space=vmem, size = 0x20000, scoped, tag = 'output window, operand 0']
    loop: start=0, step=1, limit=11
    $region2: #{allgnn_forward.3} parent=1 // loop_pre_header
      _
    $region3: #{allgnn_forward.3} parent=1 // loop_header
      %s9 = sphi 0, %s13
      %p10 = scmp.ge.s32.totalorder %s9, 11
      %s16 = sphi 0, %s28
      %s17 = sphi 0, %s24
      %s18 = sphi 0, %s16
      %s19 = sphi 0, %s17
      %s20 = sphi 0, %s18
      %s21 = sphi 0, %s19
      %s33 = sphi 0, %s35
      %s36 = sphi 0, %s33
      %s37 = sphi 0, %s36
      %s53 = sphi 0, %s37
      %s57 = sphi 0, %s57
      %s59 = sphi 0, %s57
      %s60 = sphi 0, %s59
      %s74 = sphi 0, %s60
      %s78 = sphi 0, %s78
      %s80 = sphi 0, %s78
      %s81 = sphi 0, %s80
      %s95 = sphi 0, %s81
      %s101 = sphi 0, %s103
      %s104 = sphi 0, %s101
      %s105 = sphi 0, %s104
      %s121 = sphi 0, %s105
    $region4: #{allgnn_forward.3} parent=1 // loop_header_branch
      %12 = sbr.rel (%p10) target = $region8
    $region5: #{allgnn_forward.3} parent=1 // loop_body
      %s14 = ssub.s32 %s9, 1
      %s15 = ssub.s32 %s9, 2
      %s22 = sadd.s32 1, %s17
      %p23 = scmp.ge.s32.totalorder %s22, 3
      %s24 = scalar_select %p23, 0, %s22
      %s25 = sadd.s32 1, %s16
      %s26 = scalar_select %p23, %s25, %s16
      %p27 = scmp.ge.s32.totalorder %s26, 3
      %s28 = scalar_select %p27, 0, %s26
      %s29 = ssub.s32 %s16, %s28
      %s30 = ssub.s32 %s17, %s24
      %s31 = sor.u32 %s29, %s30
      %p32 = scmp.eq.s32.totalorder %s31, 0
      %s34 = sadd.s32 %s33, 1
      %s35 = scalar_select %p32, %s33, %s34
      %p38 = pneg %p32
      %p39 = scmp.eq.s32.totalorder %s9, 8
      %p40 = por %p38, %p39
      %p41 = scmp.ne.s32.totalorder %s33, %s36
      %p42 = scmp.eq.s32.totalorder %s9, 0
      %p43 = por %p41, %p42
      %p44 = scmp.ne.s32.totalorder %s33, %s36
      %p45 = scmp.eq.s32.totalorder %s14, 8
      %p46 = por %p44, %p45
      %p47 = scmp.ne.s32.totalorder %s36, %s37
      %p48 = scmp.eq.s32.totalorder %s14, 0
      %p49 = por %p47, %p48
      %p50 = scmp.ne.s32.totalorder %s36, %s37
      %p51 = scmp.eq.s32.totalorder %s15, 8
      %p52 = por %p50, %p51
      %p54 = scmp.ne.s32.totalorder %s37, %s53
      %p55 = scmp.eq.s32.totalorder %s15, 0
      %p56 = por %p54, %p55
      %s58 = sadd.s32 %s57, 1
      %p61 = scmp.eq.s32.totalorder %s9, 8
      %p62 = scmp.ne.s32.totalorder %s57, %s59
      %p63 = scmp.eq.s32.totalorder %s9, 0
      %p64 = por %p62, %p63
      %p65 = scmp.ne.s32.totalorder %s57, %s59
      %p66 = scmp.eq.s32.totalorder %s14, 8
      %p67 = por %p65, %p66
      %p68 = scmp.ne.s32.totalorder %s59, %s60
      %p69 = scmp.eq.s32.totalorder %s14, 0
      %p70 = por %p68, %p69
      %p71 = scmp.ne.s32.totalorder %s59, %s60
      %p72 = scmp.eq.s32.totalorder %s15, 8
      %p73 = por %p71, %p72
      %p75 = scmp.ne.s32.totalorder %s60, %s74
      %p76 = scmp.eq.s32.totalorder %s15, 0
      %p77 = por %p75, %p76
      %s79 = sadd.s32 %s78, 1
      %p82 = scmp.eq.s32.totalorder %s9, 8
      %p83 = scmp.ne.s32.totalorder %s78, %s80
      %p84 = scmp.eq.s32.totalorder %s9, 0
      %p85 = por %p83, %p84
      %p86 = scmp.ne.s32.totalorder %s78, %s80
      %p87 = scmp.eq.s32.totalorder %s14, 8
      %p88 = por %p86, %p87
      %p89 = scmp.ne.s32.totalorder %s80, %s81
      %p90 = scmp.eq.s32.totalorder %s14, 0
      %p91 = por %p89, %p90
      %p92 = scmp.ne.s32.totalorder %s80, %s81
      %p93 = scmp.eq.s32.totalorder %s15, 8
      %p94 = por %p92, %p93
      %p96 = scmp.ne.s32.totalorder %s81, %s95
      %p97 = scmp.eq.s32.totalorder %s15, 0
      %p98 = por %p96, %p97
      %s99 = ssub.s32 %s16, %s28
      %p100 = scmp.eq.s32.totalorder %s99, 0
      %s102 = sadd.s32 %s101, 1
      %s103 = scalar_select %p100, %s101, %s102
      %p106 = pneg %p100
      %p107 = scmp.eq.s32.totalorder %s9, 8
      %p108 = por %p106, %p107
      %p109 = scmp.ne.s32.totalorder %s101, %s104
      %p110 = scmp.eq.s32.totalorder %s9, 0
      %p111 = por %p109, %p110
      %p112 = scmp.ne.s32.totalorder %s101, %s104
      %p113 = scmp.eq.s32.totalorder %s14, 8
      %p114 = por %p112, %p113
      %p115 = scmp.ne.s32.totalorder %s104, %s105
      %p116 = scmp.eq.s32.totalorder %s14, 0
      %p117 = por %p115, %p116
      %p118 = scmp.ne.s32.totalorder %s104, %s105
      %p119 = scmp.eq.s32.totalorder %s15, 8
      %p120 = por %p118, %p119
      %p122 = scmp.ne.s32.totalorder %s105, %s121
      %p123 = scmp.eq.s32.totalorder %s15, 0
      %p124 = por %p122, %p123
      %p125 = scmp.le.s32.totalorder 1, %s9
      %p126 = scmp.lt.s32.totalorder %s9, 10
      %p127 = pnand %p125, %p126
      %p128 = pneg %p127
      // Predicated region
      $region9: #{allgnn_forward.3} parent=5 // pred_check
        _
      $region10: #{allgnn_forward.3} parent=5 // pred_check_branch
        %130 = sbr.rel (%p127) target = $region12
      $region11: #{allgnn_forward.3} parent=5 // pred_region
        %s131 = ssub.s32 %s9, 1
        // Predicated region
        $region13: #{allgnn_forward.3} parent=11 // pred_check
          %p132 = pneg %p70
        $region14: #{allgnn_forward.3} parent=11 // pred_check_branch
          %134 = sbr.rel (%p132) target = $region16
        $region15: #{allgnn_forward.3} parent=11 // pred_region
          _
        $region16: #{allgnn_forward.3} parent=11 // pred_fallthru
          _
        // Predicated region
        $region17: #{allgnn_forward.3} parent=11 // pred_check
          %p135 = pneg %p91
        $region18: #{allgnn_forward.3} parent=11 // pred_check_branch
          %137 = sbr.rel (%p135) target = $region20
        $region19: #{allgnn_forward.3} parent=11 // pred_region
          _
        $region20: #{allgnn_forward.3} parent=11 // pred_fallthru
          _
      $region12: #{allgnn_forward.3} parent=5 // pred_fallthru
        _
      %p138 = scmp.lt.s32.totalorder %s9, 9
      // Predicated region
      $region21: #{allgnn_forward.3} parent=5 // pred_check
        %p139 = pneg %p138
      $region22: #{allgnn_forward.3} parent=5 // pred_check_branch
        %141 = sbr.rel (%p139) target = $region24
      $region23: #{allgnn_forward.3} parent=5 // pred_region
        // Predicated region
        $region25: #{allgnn_forward.3} parent=23 // pred_check
          %p142 = pneg %p43
        $region26: #{allgnn_forward.3} parent=23 // pred_check_branch
          %144 = sbr.rel (%p142) target = $region28
        $region27: #{allgnn_forward.3} parent=23 // pred_region
          %s145 = sand.u32 %s33, 1
          %s146 = sand.u32 %s33, 1
          %s147 = smul.addr %s146, 128
          %s148 = scalar_lea.vmem [#allocation2], %s147
          %s149 = smul.u32 16, %s16
          %s150 = ssub.s32 38, %s149
          %p151 = scmp.lt.s32.totalorder %s150, 16
          %s152 = scalar_select %p151, %s150, 16
          %s153 = smul.u32 8, %s152
          %p154 = scmp.ne.s32.totalorder 0, %s153
          %s155 = smul.addr %s149, 3
          %s156 = sadd.s32 %s17, %s155
          %s157 = smul.addr %s156, 8
          %s158 = scalar_lea.vmem %s0, %s157
          // Predicated region
          $region29: #{allgnn_forward.3} parent=27 // pred_check
            %p159 = pneg %p154
          $region30: #{allgnn_forward.3} parent=27 // pred_check_branch
            %161 = sbr.rel (%p159) target = $region32
          $region31: #{allgnn_forward.3} parent=27 // pred_region
            // Predicated region
            $region33: #{allgnn_forward.3} parent=31 // pred_check
              _
            $region34: #{allgnn_forward.3} parent=31 // pred_check_branch
              %163 = sbr.rel (0) target = $region36
            $region35: #{allgnn_forward.3} parent=31 // pred_region
              // Predicated region
              $region55: #{allgnn_forward.3} parent=35 // pred_check
                _
              $region56: #{allgnn_forward.3} parent=35 // pred_check_branch
                %243 = sbr.rel (0) target = $region58
              $region57: #{allgnn_forward.3} parent=35 // pred_region
                %s244 = sshrl.u32 %s152, 4
                // While loop
                $region59: #{allgnn_forward.3} parent=57 // loop_pre_header
                  _
                $region60: #{allgnn_forward.3} parent=57 // loop_header
                  %s246 = sphi 0, %s248
                  %p247 = scmp.ge.s32.totalorder %s246, %s244
                  %s251 = sphi 0, %s288
                  %s252 = sphi %s158, %s291
                  %s253 = sphi %s148, %s292
                $region61: #{allgnn_forward.3} parent=57 // loop_header_branch
                  %250 = sbr.rel (%p247) target = $region65
                $region62: #{allgnn_forward.3} parent=57 // loop_body
                  %v254 = vld [vmem:[%s252] sm:$0xff]
                  %255 = vst [vmem:[%s253] sm:$0xff] %v254
                  %v256 = vld [vmem:[%s252 + $0x18] sm:$0xff]
                  %257 = vst [vmem:[%s253 + $0x8] sm:$0xff] %v256
                  %v258 = vld [vmem:[%s252 + $0x30] sm:$0xff]
                  %259 = vst [vmem:[%s253 + $0x10] sm:$0xff] %v258
                  %v260 = vld [vmem:[%s252 + $0x48] sm:$0xff]
                  %261 = vst [vmem:[%s253 + $0x18] sm:$0xff] %v260
                  %v262 = vld [vmem:[%s252 + $0x60] sm:$0xff]
                  %263 = vst [vmem:[%s253 + $0x20] sm:$0xff] %v262
                  %v264 = vld [vmem:[%s252 + $0x78] sm:$0xff]
                  %265 = vst [vmem:[%s253 + $0x28] sm:$0xff] %v264
                  %v266 = vld [vmem:[%s252 + $0x90] sm:$0xff]
                  %267 = vst [vmem:[%s253 + $0x30] sm:$0xff] %v266
                  %v268 = vld [vmem:[%s252 + $0xa8] sm:$0xff]
                  %269 = vst [vmem:[%s253 + $0x38] sm:$0xff] %v268
                  %v270 = vld [vmem:[%s252 + $0xc0] sm:$0xff]
                  %271 = vst [vmem:[%s253 + $0x40] sm:$0xff] %v270
                  %v272 = vld [vmem:[%s252 + $0xd8] sm:$0xff]
                  %273 = vst [vmem:[%s253 + $0x48] sm:$0xff] %v272
                  %v274 = vld [vmem:[%s252 + $0xf0] sm:$0xff]
                  %275 = vst [vmem:[%s253 + $0x50] sm:$0xff] %v274
                  %v276 = vld [vmem:[%s252 + $0x108] sm:$0xff]
                  %277 = vst [vmem:[%s253 + $0x58] sm:$0xff] %v276
                  %v278 = vld [vmem:[%s252 + $0x120] sm:$0xff]
                  %279 = vst [vmem:[%s253 + $0x60] sm:$0xff] %v278
                  %v280 = vld [vmem:[%s252 + $0x138] sm:$0xff]
                  %281 = vst [vmem:[%s253 + $0x68] sm:$0xff] %v280
                  %v282 = vld [vmem:[%s252 + $0x150] sm:$0xff]
                  %283 = vst [vmem:[%s253 + $0x70] sm:$0xff] %v282
                  %v284 = vld [vmem:[%s252 + $0x168] sm:$0xff]
                  %285 = vst [vmem:[%s253 + $0x78] sm:$0xff] %v284
                  %s286 = sadd.s32 1, %s251
                  %p287 = scmp.ge.s32.totalorder %s286, %s244
                  %s288 = scalar_select %p287, 0, %s286
                  %s289 = smul.u32 %s288, 384
                  %s290 = smul.u32 %s288, 128
                  %s291 = scalar_lea.vmem %s158, %s289
                  %s292 = scalar_lea.vmem %s148, %s290 [#allocation2]
                $region63: #{allgnn_forward.3} parent=57 // loop_footer
                  %s248 = sadd.s32 %s246, 1
                $region64: #{allgnn_forward.3} parent=57 // loop_footer_branch
                  %245 = sbr.rel target = $region60
                $region65: #{allgnn_forward.3} parent=57 // loop_exit
                  _
                %s293 = sshrl.u32 %s152, 4
                %s294 = sand.u32 %s152, 15
                %s295 = smul.u32 %s293, 16
                %s296 = smul.u32 24, %s295
                %s297 = scalar_lea.vmem %s158, %s296
                %s298 = smul.u32 8, %s295
                %s299 = scalar_lea.vmem %s148, %s298 [#allocation2]
                // While loop
                $region66: #{allgnn_forward.3} parent=57 // loop_pre_header
                  _
                $region67: #{allgnn_forward.3} parent=57 // loop_header
                  %s301 = sphi 0, %s303
                  %p302 = scmp.ge.s32.totalorder %s301, %s294
                  %s306 = sphi 0, %s313
                  %s307 = sphi %s297, %s316
                  %s308 = sphi %s299, %s317
                $region68: #{allgnn_forward.3} parent=57 // loop_header_branch
                  %305 = sbr.rel (%p302) target = $region72
                $region69: #{allgnn_forward.3} parent=57 // loop_body
                  %v309 = vld [vmem:[%s307] sm:$0xff]
                  %310 = vst [vmem:[%s308] sm:$0xff] %v309
                  %s311 = sadd.s32 1, %s306
                  %p312 = scmp.ge.s32.totalorder %s311, %s294
                  %s313 = scalar_select %p312, 0, %s311
                  %s314 = smul.u32 %s313, 24
                  %s315 = smul.u32 %s313, 8
                  %s316 = scalar_lea.vmem %s297, %s314
                  %s317 = scalar_lea.vmem %s299, %s315 [#allocation2]
                $region70: #{allgnn_forward.3} parent=57 // loop_footer
                  %s303 = sadd.s32 %s301, 1
                $region71: #{allgnn_forward.3} parent=57 // loop_footer_branch
                  %300 = sbr.rel target = $region67
                $region72: #{allgnn_forward.3} parent=57 // loop_exit
                  _
              $region58: #{allgnn_forward.3} parent=35 // pred_fallthru
                _
              // Predicated region
              $region73: #{allgnn_forward.3} parent=35 // pred_check
                _
              $region74: #{allgnn_forward.3} parent=35 // pred_check_branch
                %319 = sbr.rel target = $region76
              $region75: #{allgnn_forward.3} parent=35 // pred_region
                _
              $region76: #{allgnn_forward.3} parent=35 // pred_fallthru
                _
            $region36: #{allgnn_forward.3} parent=31 // pred_fallthru
              _
            // Predicated region
            $region37: #{allgnn_forward.3} parent=31 // pred_check
              _
            $region38: #{allgnn_forward.3} parent=31 // pred_check_branch
              %165 = sbr.rel target = $region40
            $region39: #{allgnn_forward.3} parent=31 // pred_region
              %s167 = ssub.s32 256, 1
              %s168 = sshrl.u32 %s152, 4
              // While loop
              $region41: #{allgnn_forward.3} parent=39 // loop_pre_header
                _
              $region42: #{allgnn_forward.3} parent=39 // loop_header
                %s170 = sphi 0, %s172
                %p171 = scmp.ge.s32.totalorder %s170, %s168
                %s175 = sphi 0, %s212
                %s176 = sphi %s158, %s215
                %s177 = sphi %s148, %s216
              $region43: #{allgnn_forward.3} parent=39 // loop_header_branch
                %174 = sbr.rel (%p171) target = $region47
              $region44: #{allgnn_forward.3} parent=39 // loop_body
                %v178 = vld [vmem:[%s176] sm:%s167]
                %179 = vst [vmem:[%s177] sm:%s167] %v178
                %v180 = vld [vmem:[%s176 + $0x18] sm:%s167]
                %181 = vst [vmem:[%s177 + $0x8] sm:%s167] %v180
                %v182 = vld [vmem:[%s176 + $0x30] sm:%s167]
                %183 = vst [vmem:[%s177 + $0x10] sm:%s167] %v182
                %v184 = vld [vmem:[%s176 + $0x48] sm:%s167]
                %185 = vst [vmem:[%s177 + $0x18] sm:%s167] %v184
                %v186 = vld [vmem:[%s176 + $0x60] sm:%s167]
                %187 = vst [vmem:[%s177 + $0x20] sm:%s167] %v186
                %v188 = vld [vmem:[%s176 + $0x78] sm:%s167]
                %189 = vst [vmem:[%s177 + $0x28] sm:%s167] %v188
                %v190 = vld [vmem:[%s176 + $0x90] sm:%s167]
                %191 = vst [vmem:[%s177 + $0x30] sm:%s167] %v190
                %v192 = vld [vmem:[%s176 + $0xa8] sm:%s167]
                %193 = vst [vmem:[%s177 + $0x38] sm:%s167] %v192
                %v194 = vld [vmem:[%s176 + $0xc0] sm:%s167]
                %195 = vst [vmem:[%s177 + $0x40] sm:%s167] %v194
                %v196 = vld [vmem:[%s176 + $0xd8] sm:%s167]
                %197 = vst [vmem:[%s177 + $0x48] sm:%s167] %v196
                %v198 = vld [vmem:[%s176 + $0xf0] sm:%s167]
                %199 = vst [vmem:[%s177 + $0x50] sm:%s167] %v198
                %v200 = vld [vmem:[%s176 + $0x108] sm:%s167]
                %201 = vst [vmem:[%s177 + $0x58] sm:%s167] %v200
                %v202 = vld [vmem:[%s176 + $0x120] sm:%s167]
                %203 = vst [vmem:[%s177 + $0x60] sm:%s167] %v202
                %v204 = vld [vmem:[%s176 + $0x138] sm:%s167]
                %205 = vst [vmem:[%s177 + $0x68] sm:%s167] %v204
                %v206 = vld [vmem:[%s176 + $0x150] sm:%s167]
                %207 = vst [vmem:[%s177 + $0x70] sm:%s167] %v206
                %v208 = vld [vmem:[%s176 + $0x168] sm:%s167]
                %209 = vst [vmem:[%s177 + $0x78] sm:%s167] %v208
                %s210 = sadd.s32 1, %s175
                %p211 = scmp.ge.s32.totalorder %s210, %s168
                %s212 = scalar_select %p211, 0, %s210
                %s213 = smul.u32 %s212, 384
                %s214 = smul.u32 %s212, 128
                %s215 = scalar_lea.vmem %s158, %s213
                %s216 = scalar_lea.vmem %s148, %s214 [#allocation2]
              $region45: #{allgnn_forward.3} parent=39 // loop_footer
                %s172 = sadd.s32 %s170, 1
              $region46: #{allgnn_forward.3} parent=39 // loop_footer_branch
                %169 = sbr.rel target = $region42
              $region47: #{allgnn_forward.3} parent=39 // loop_exit
                _
              %s217 = sshrl.u32 %s152, 4
              %s218 = sand.u32 %s152, 15
              %s219 = smul.u32 %s217, 16
              %s220 = smul.u32 24, %s219
              %s221 = scalar_lea.vmem %s158, %s220
              %s222 = smul.u32 8, %s219
              %s223 = scalar_lea.vmem %s148, %s222 [#allocation2]
              // While loop
              $region48: #{allgnn_forward.3} parent=39 // loop_pre_header
                _
              $region49: #{allgnn_forward.3} parent=39 // loop_header
                %s225 = sphi 0, %s227
                %p226 = scmp.ge.s32.totalorder %s225, %s218
                %s230 = sphi 0, %s237
                %s231 = sphi %s221, %s240
                %s232 = sphi %s223, %s241
              $region50: #{allgnn_forward.3} parent=39 // loop_header_branch
                %229 = sbr.rel (%p226) target = $region54
              $region51: #{allgnn_forward.3} parent=39 // loop_body
                %v233 = vld [vmem:[%s231] sm:%s167]
                %234 = vst [vmem:[%s232] sm:%s167] %v233
                %s235 = sadd.s32 1, %s230
                %p236 = scmp.ge.s32.totalorder %s235, %s218
                %s237 = scalar_select %p236, 0, %s235
                %s238 = smul.u32 %s237, 24
                %s239 = smul.u32 %s237, 8
                %s240 = scalar_lea.vmem %s221, %s238
                %s241 = scalar_lea.vmem %s223, %s239 [#allocation2]
              $region52: #{allgnn_forward.3} parent=39 // loop_footer
                %s227 = sadd.s32 %s225, 1
              $region53: #{allgnn_forward.3} parent=39 // loop_footer_branch
                %224 = sbr.rel target = $region49
              $region54: #{allgnn_forward.3} parent=39 // loop_exit
                _
            $region40: #{allgnn_forward.3} parent=31 // pred_fallthru
              _
          $region32: #{allgnn_forward.3} parent=27 // pred_fallthru
            _
          %320 = vnop
        $region28: #{allgnn_forward.3} parent=23 // pred_fallthru
          _
      $region24: #{allgnn_forward.3} parent=5 // pred_fallthru
        _
      %p321 = scmp.le.s32.totalorder 1, %s9
      %p322 = scmp.lt.s32.totalorder %s9, 10
      %p323 = pnand %p321, %p322
      %p324 = pneg %p323
      // Predicated region
      $region77: #{allgnn_forward.3} parent=5 // pred_check
        _
      $region78: #{allgnn_forward.3} parent=5 // pred_check_branch
        %326 = sbr.rel (%p323) target = $region80
      $region79: #{allgnn_forward.3} parent=5 // pred_region
        %s327 = ssub.s32 %s9, 1
        %s328 = sand.u32 %s36, 1
        %s329 = sand.u32 %s36, 1
        %s330 = smul.addr %s329, 128
        %s331 = scalar_lea.vmem [#allocation2], %s330
        // Predicated region
        $region81: #{allgnn_forward.3} parent=79 // pred_check
          %p332 = pneg %p49
        $region82: #{allgnn_forward.3} parent=79 // pred_check_branch
          %334 = sbr.rel (%p332) target = $region84
        $region83: #{allgnn_forward.3} parent=79 // pred_region
          _
        $region84: #{allgnn_forward.3} parent=79 // pred_fallthru
          _
        %s335 = sand.u32 %s36, 1
        %s336 = sand.u32 %s36, 1
        %s337 = smul.addr %s336, 128
        %s338 = scalar_lea.vmem [#allocation2], %s337
        %p339 = pneg %p49
        %p340 = pneg %p46
        %p341 = pneg %p70
        %p342 = pneg %p67
        %p343 = pneg %p91
        %p344 = pneg %p88
        %p345 = pneg %p117
        %p346 = pneg %p114
        %s347 = sand.u32 %s104, 1
        %s348 = sand.u32 %s104, 1
        %s349 = smul.addr %s348, 128
        %s350 = scalar_lea.vmem [#allocation3], %s349
        %s351 = smul.u32 16, %s18
        %s352 = ssub.s32 38, %s351
        %p353 = scmp.lt.s32.totalorder %s352, 16
        %s354 = scalar_select %p353, %s352, 16
        %s355 = smul.u32 8, %s354
        %s356 = smul.u32 16, %s18
        %s357 = ssub.s32 38, %s356
        %p358 = scmp.lt.s32.totalorder %s357, 16
        %s359 = scalar_select %p358, %s357, 16
        %s360 = smul.u32 8, %s359
        %p361 = scmp.eq.s32.totalorder %s19, 0
        // Predicated region
        $region85: #{allgnn_forward.3} parent=79 // pred_check
          %p362 = pneg %p361
        $region86: #{allgnn_forward.3} parent=79 // pred_check_branch
          %364 = sbr.rel (%p362) target = $region88
        $region87: #{allgnn_forward.3} parent=79 // pred_region
          %365 = vst [vmem:[%s350] sm:$0xff] 0.0
          %366 = vst [vmem:[%s350 + $0x8] sm:$0xff] 0.0
          %367 = vst [vmem:[%s350 + $0x10] sm:$0xff] 0.0
          %368 = vst [vmem:[%s350 + $0x18] sm:$0xff] 0.0
          %369 = vst [vmem:[%s350 + $0x20] sm:$0xff] 0.0
          %370 = vst [vmem:[%s350 + $0x28] sm:$0xff] 0.0
          %371 = vst [vmem:[%s350 + $0x30] sm:$0xff] 0.0
          %372 = vst [vmem:[%s350 + $0x38] sm:$0xff] 0.0
          %373 = vst [vmem:[%s350 + $0x40] sm:$0xff] 0.0
          %374 = vst [vmem:[%s350 + $0x48] sm:$0xff] 0.0
          %375 = vst [vmem:[%s350 + $0x50] sm:$0xff] 0.0
          %376 = vst [vmem:[%s350 + $0x58] sm:$0xff] 0.0
          %377 = vst [vmem:[%s350 + $0x60] sm:$0xff] 0.0
          %378 = vst [vmem:[%s350 + $0x68] sm:$0xff] 0.0
          %379 = vst [vmem:[%s350 + $0x70] sm:$0xff] 0.0
          %380 = vst [vmem:[%s350 + $0x78] sm:$0xff] 0.0
        $region88: #{allgnn_forward.3} parent=79 // pred_fallthru
          _
        %v381 = vld [vmem:[%s331] sm:$0xff]
        %v382 = vld [vmem:[%s331 + $0x8] sm:$0xff]
        %v383 = vld [vmem:[%s331 + $0x10] sm:$0xff]
        %v384 = vld [vmem:[%s331 + $0x18] sm:$0xff]
        %v385 = vld [vmem:[%s331 + $0x20] sm:$0xff]
        %v386 = vld [vmem:[%s331 + $0x28] sm:$0xff]
        %v387 = vld [vmem:[%s331 + $0x30] sm:$0xff]
        %v388 = vld [vmem:[%s331 + $0x38] sm:$0xff]
        %v389 = vld [vmem:[%s331 + $0x40] sm:$0xff]
        %v390 = vld [vmem:[%s331 + $0x48] sm:$0xff]
        %v391 = vld [vmem:[%s331 + $0x50] sm:$0xff]
        %v392 = vld [vmem:[%s331 + $0x58] sm:$0xff]
        %v393 = vld [vmem:[%s331 + $0x60] sm:$0xff]
        %v394 = vld [vmem:[%s331 + $0x68] sm:$0xff]
        %v395 = vld [vmem:[%s331 + $0x70] sm:$0xff]
        %v396 = vld [vmem:[%s331 + $0x78] sm:$0xff]
        %p397 = scmp.eq.s32.totalorder %s19, 2
        %s398 = scalar_select %p397, 44, 128
        %v399 = vlaneseq
        %v400 = vand.u32 %v399, 127
        %v401 = vstv %s398
        %vm402 = vcmp.lt.s32.totalorder %v400, %v401
        %v403 = vsel %vm402, %v381, 0.0
        %v404 = vsel %vm402, %v382, 0.0
        %v405 = vsel %vm402, %v383, 0.0
        %v406 = vsel %vm402, %v384, 0.0
        %v407 = vsel %vm402, %v385, 0.0
        %v408 = vsel %vm402, %v386, 0.0
        %v409 = vsel %vm402, %v387, 0.0
        %v410 = vsel %vm402, %v388, 0.0
        %v411 = vsel %vm402, %v389, 0.0
        %v412 = vsel %vm402, %v390, 0.0
        %v413 = vsel %vm402, %v391, 0.0
        %v414 = vsel %vm402, %v392, 0.0
        %v415 = vsel %vm402, %v393, 0.0
        %v416 = vsel %vm402, %v394, 0.0
        %v417 = vsel %vm402, %v395, 0.0
        %v418 = vsel %vm402, %v396, 0.0
        %v419 = vpack.c.bf16 %v404, %v403
        %v420 = vpack.c.bf16 %v406, %v405
        %v421 = vpack.c.bf16 %v408, %v407
        %v422 = vpack.c.bf16 %v410, %v409
        %v423 = vpack.c.bf16 %v412, %v411
        %v424 = vpack.c.bf16 %v414, %v413
        %v425 = vpack.c.bf16 %v416, %v415
        %v426 = vpack.c.bf16 %v418, %v417
        %s427 = smul.u32 %s19, 128
        %s428 = sshra.s32 %s427, 3
        %s429 = sand.u32 %s427, 7
        %s430 = smul.addr %s428, 4
        %s431 = scalar_lea.vmem %s1, %s430
        %v432 = vld [vmem:[%s431] sm:$0xf]
        %v433 = vld [vmem:[%s431 + $0x4] sm:$0xf]
        %v434 = vld [vmem:[%s431 + $0x8] sm:$0xf]
        %v435 = vld [vmem:[%s431 + $0xc] sm:$0xf]
        %v436 = vld [vmem:[%s431 + $0x10] sm:$0xf]
        %v437 = vld [vmem:[%s431 + $0x14] sm:$0xf]
        %v438 = vld [vmem:[%s431 + $0x18] sm:$0xf]
        %v439 = vld [vmem:[%s431 + $0x1c] sm:$0xf]
        %v440 = vld [vmem:[%s431 + $0x20] sm:$0xf]
        %v441 = vld [vmem:[%s431 + $0x24] sm:$0xf]
        %v442 = vld [vmem:[%s431 + $0x28] sm:$0xf]
        %v443 = vld [vmem:[%s431 + $0x2c] sm:$0xf]
        %v444 = vld [vmem:[%s431 + $0x30] sm:$0xf]
        %v445 = vld [vmem:[%s431 + $0x34] sm:$0xf]
        %v446 = vld [vmem:[%s431 + $0x38] sm:$0xf]
        %v447 = vld [vmem:[%s431 + $0x3c] sm:$0xf]
        %v448 = vld [vmem:[%s350] sm:$0xff]
        %v449 = vld [vmem:[%s350 + $0x8] sm:$0xff]
        %v450 = vld [vmem:[%s350 + $0x10] sm:$0xff]
        %v451 = vld [vmem:[%s350 + $0x18] sm:$0xff]
        %v452 = vld [vmem:[%s350 + $0x20] sm:$0xff]
        %v453 = vld [vmem:[%s350 + $0x28] sm:$0xff]
        %v454 = vld [vmem:[%s350 + $0x30] sm:$0xff]
        %v455 = vld [vmem:[%s350 + $0x38] sm:$0xff]
        %v456 = vld [vmem:[%s350 + $0x40] sm:$0xff]
        %v457 = vld [vmem:[%s350 + $0x48] sm:$0xff]
        %v458 = vld [vmem:[%s350 + $0x50] sm:$0xff]
        %v459 = vld [vmem:[%s350 + $0x58] sm:$0xff]
        %v460 = vld [vmem:[%s350 + $0x60] sm:$0xff]
        %v461 = vld [vmem:[%s350 + $0x68] sm:$0xff]
        %v462 = vld [vmem:[%s350 + $0x70] sm:$0xff]
        %v463 = vld [vmem:[%s350 + $0x78] sm:$0xff]
        %v480 = vunpack.c.l.b16 %v432
        %v481 = vunpack.c.l.b16 %v433
        %v482 = vunpack.c.l.b16 %v434
        %v483 = vunpack.c.l.b16 %v435
        %v484 = vunpack.c.l.b16 %v436
        %v485 = vunpack.c.l.b16 %v437
        %v486 = vunpack.c.l.b16 %v438
        %v487 = vunpack.c.l.b16 %v439
        %v488 = vunpack.c.l.b16 %v440
        %v489 = vunpack.c.l.b16 %v441
        %v490 = vunpack.c.l.b16 %v442
        %v491 = vunpack.c.l.b16 %v443
        %v492 = vunpack.c.l.b16 %v444
        %v493 = vunpack.c.l.b16 %v445
        %v494 = vunpack.c.l.b16 %v446
        %v495 = vunpack.c.l.b16 %v447
        %v496 = vpack.c.b16 %v481, %v480
        %v497 = vpack.c.b16 %v483, %v482
        %v498 = vpack.c.b16 %v485, %v484
        %v499 = vpack.c.b16 %v487, %v486
        %v500 = vpack.c.b16 %v489, %v488
        %v501 = vpack.c.b16 %v491, %v490
        %v502 = vpack.c.b16 %v493, %v492
        %v503 = vpack.c.b16 %v495, %v494
        %512 = vmatpush.bf16.msra.mxu0 %v503
        %513 = vmatpush.bf16.msra.mxu0 %v502
        %514 = vmatpush.bf16.msra.mxu0 %v501
        %515 = vmatpush.bf16.msra.mxu0 %v500
        %516 = vmatpush.bf16.msra.mxu0 %v499
        %517 = vmatpush.bf16.msra.mxu0 %v498
        %518 = vmatpush.bf16.msra.mxu0 %v497
        %519 = vmatpush.bf16.msra.mxu0 %v496
        %520 = vmatmul.bf16.gmra.mxu0 %v419
        %v521 = vpop.f32.mrf.mxu0
        %v522 = vadd.f32 0.0, %v521
        %v523 = vpop.f32.mrf.mxu0
        %v524 = vadd.f32 0.0, %v523
        %525 = vmatmul.bf16.gmra.mxu0 %v420
        %v526 = vpop.f32.mrf.mxu0
        %v527 = vadd.f32 0.0, %v526
        %v528 = vpop.f32.mrf.mxu0
        %v529 = vadd.f32 0.0, %v528
        %530 = vmatmul.bf16.gmra.mxu0 %v421
        %v531 = vpop.f32.mrf.mxu0
        %v532 = vadd.f32 0.0, %v531
        %v533 = vpop.f32.mrf.mxu0
        %v534 = vadd.f32 0.0, %v533
        %535 = vmatmul.bf16.gmra.mxu0 %v422
        %v536 = vpop.f32.mrf.mxu0
        %v537 = vadd.f32 0.0, %v536
        %v538 = vpop.f32.mrf.mxu0
        %v539 = vadd.f32 0.0, %v538
        %540 = vmatmul.bf16.gmra.mxu0 %v423
        %v541 = vpop.f32.mrf.mxu0
        %v542 = vadd.f32 0.0, %v541
        %v543 = vpop.f32.mrf.mxu0
        %v544 = vadd.f32 0.0, %v543
        %545 = vmatmul.bf16.gmra.mxu0 %v424
        %v546 = vpop.f32.mrf.mxu0
        %v547 = vadd.f32 0.0, %v546
        %v548 = vpop.f32.mrf.mxu0
        %v549 = vadd.f32 0.0, %v548
        %550 = vmatmul.bf16.gmra.mxu0 %v425
        %v551 = vpop.f32.mrf.mxu0
        %v552 = vadd.f32 0.0, %v551
        %v553 = vpop.f32.mrf.mxu0
        %v554 = vadd.f32 0.0, %v553
        %555 = vmatmul.bf16.gmra.mxu0 %v426
        %v556 = vpop.f32.mrf.mxu0
        %v557 = vadd.f32 0.0, %v556
        %v558 = vpop.f32.mrf.mxu0
        %v559 = vadd.f32 0.0, %v558
        %560 = vdwg.mxu0
        %v561 = vadd.f32 %v448, %v522
        %v562 = vadd.f32 %v449, %v524
        %v563 = vadd.f32 %v450, %v527
        %v564 = vadd.f32 %v451, %v529
        %v565 = vadd.f32 %v452, %v532
        %v566 = vadd.f32 %v453, %v534
        %v567 = vadd.f32 %v454, %v537
        %v568 = vadd.f32 %v455, %v539
        %v569 = vadd.f32 %v456, %v542
        %v570 = vadd.f32 %v457, %v544
        %v571 = vadd.f32 %v458, %v547
        %v572 = vadd.f32 %v459, %v549
        %v573 = vadd.f32 %v460, %v552
        %v574 = vadd.f32 %v461, %v554
        %v575 = vadd.f32 %v462, %v557
        %v576 = vadd.f32 %v463, %v559
        %577 = vst [vmem:[%s350] sm:$0xff] %v561
        %578 = vst [vmem:[%s350 + $0x8] sm:$0xff] %v562
        %579 = vst [vmem:[%s350 + $0x10] sm:$0xff] %v563
        %580 = vst [vmem:[%s350 + $0x18] sm:$0xff] %v564
        %581 = vst [vmem:[%s350 + $0x20] sm:$0xff] %v565
        %582 = vst [vmem:[%s350 + $0x28] sm:$0xff] %v566
        %583 = vst [vmem:[%s350 + $0x30] sm:$0xff] %v567
        %584 = vst [vmem:[%s350 + $0x38] sm:$0xff] %v568
        %585 = vst [vmem:[%s350 + $0x40] sm:$0xff] %v569
        %586 = vst [vmem:[%s350 + $0x48] sm:$0xff] %v570
        %587 = vst [vmem:[%s350 + $0x50] sm:$0xff] %v571
        %588 = vst [vmem:[%s350 + $0x58] sm:$0xff] %v572
        %589 = vst [vmem:[%s350 + $0x60] sm:$0xff] %v573
        %590 = vst [vmem:[%s350 + $0x68] sm:$0xff] %v574
        %591 = vst [vmem:[%s350 + $0x70] sm:$0xff] %v575
        %592 = vst [vmem:[%s350 + $0x78] sm:$0xff] %v576
        // Predicated region
        $region89: #{allgnn_forward.3} parent=79 // pred_check
          %p593 = pneg %p397
        $region90: #{allgnn_forward.3} parent=79 // pred_check_branch
          %595 = sbr.rel (%p593) target = $region92
        $region91: #{allgnn_forward.3} parent=79 // pred_region
          %v596 = vld [vmem:[%s350] sm:$0xff]
          %v597 = vld [vmem:[%s350 + $0x8] sm:$0xff]
          %v598 = vld [vmem:[%s350 + $0x10] sm:$0xff]
          %v599 = vld [vmem:[%s350 + $0x18] sm:$0xff]
          %v600 = vld [vmem:[%s350 + $0x20] sm:$0xff]
          %v601 = vld [vmem:[%s350 + $0x28] sm:$0xff]
          %v602 = vld [vmem:[%s350 + $0x30] sm:$0xff]
          %v603 = vld [vmem:[%s350 + $0x38] sm:$0xff]
          %v604 = vld [vmem:[%s350 + $0x40] sm:$0xff]
          %v605 = vld [vmem:[%s350 + $0x48] sm:$0xff]
          %v606 = vld [vmem:[%s350 + $0x50] sm:$0xff]
          %v607 = vld [vmem:[%s350 + $0x58] sm:$0xff]
          %v608 = vld [vmem:[%s350 + $0x60] sm:$0xff]
          %v609 = vld [vmem:[%s350 + $0x68] sm:$0xff]
          %v610 = vld [vmem:[%s350 + $0x70] sm:$0xff]
          %v611 = vld [vmem:[%s350 + $0x78] sm:$0xff]
          %v612 = vadd.f32 %v596, 1.0
          %v613 = vadd.f32 %v597, 1.0
          %v614 = vadd.f32 %v598, 1.0
          %v615 = vadd.f32 %v599, 1.0
          %v616 = vadd.f32 %v600, 1.0
          %v617 = vadd.f32 %v601, 1.0
          %v618 = vadd.f32 %v602, 1.0
          %v619 = vadd.f32 %v603, 1.0
          %v620 = vadd.f32 %v604, 1.0
          %v621 = vadd.f32 %v605, 1.0
          %v622 = vadd.f32 %v606, 1.0
          %v623 = vadd.f32 %v607, 1.0
          %v624 = vadd.f32 %v608, 1.0
          %v625 = vadd.f32 %v609, 1.0
          %v626 = vadd.f32 %v610, 1.0
          %v627 = vadd.f32 %v611, 1.0
          %629 = vset.pattern.permute.xlu0 127
          %630 = vperm.xlu0 %629, %v612
          %v631 = vpop.permute.xlu0 %630
          %634 = vset.pattern.permute.xlu0 127
          %635 = vperm.xlu0 %634, %v613
          %v636 = vpop.permute.xlu0 %635
          %639 = vset.pattern.permute.xlu0 127
          %640 = vperm.xlu0 %639, %v614
          %v641 = vpop.permute.xlu0 %640
          %644 = vset.pattern.permute.xlu0 127
          %645 = vperm.xlu0 %644, %v615
          %v646 = vpop.permute.xlu0 %645
          %649 = vset.pattern.permute.xlu0 127
          %650 = vperm.xlu0 %649, %v616
          %v651 = vpop.permute.xlu0 %650
          %654 = vset.pattern.permute.xlu0 127
          %655 = vperm.xlu0 %654, %v617
          %v656 = vpop.permute.xlu0 %655
          %659 = vset.pattern.permute.xlu0 127
          %660 = vperm.xlu0 %659, %v618
          %v661 = vpop.permute.xlu0 %660
          %664 = vset.pattern.permute.xlu0 127
          %665 = vperm.xlu0 %664, %v619
          %v666 = vpop.permute.xlu0 %665
          %669 = vset.pattern.permute.xlu0 127
          %670 = vperm.xlu0 %669, %v620
          %v671 = vpop.permute.xlu0 %670
          %674 = vset.pattern.permute.xlu0 127
          %675 = vperm.xlu0 %674, %v621
          %v676 = vpop.permute.xlu0 %675
          %679 = vset.pattern.permute.xlu0 127
          %680 = vperm.xlu0 %679, %v622
          %v681 = vpop.permute.xlu0 %680
          %684 = vset.pattern.permute.xlu0 127
          %685 = vperm.xlu0 %684, %v623
          %v686 = vpop.permute.xlu0 %685
          %689 = vset.pattern.permute.xlu0 127
          %690 = vperm.xlu0 %689, %v624
          %v691 = vpop.permute.xlu0 %690
          %694 = vset.pattern.permute.xlu0 127
          %695 = vperm.xlu0 %694, %v625
          %v696 = vpop.permute.xlu0 %695
          %699 = vset.pattern.permute.xlu0 127
          %700 = vperm.xlu0 %699, %v626
          %v701 = vpop.permute.xlu0 %700
          %704 = vset.pattern.permute.xlu0 127
          %705 = vperm.xlu0 %704, %v627
          %v706 = vpop.permute.xlu0 %705
          %v708 = vrcp.pop %v631
          %v709 = vmul.f32 %v631, %v708
          %v710 = vsub.f32 1.0, %v709
          %v711 = vmul.f32 %v708, %v710
          %v712 = vadd.f32 %v708, %v711
          %vm713 = vweird.f32 %v631
          %vm714 = vweird.f32 %v708
          %vm715 = vmor %vm713, %vm714
          %v716 = vsel %vm715, %v708, %v712
          %v717 = vand.u32 2147483647, %v631
          %vm718 = vcmp.eq.f32.partialorder %v717, 8.507059e+37
          %v719 = vand.u32 %v631, 2147483648
          %v720 = vor.u32 1.1754944e-38, %v719
          %v721 = vsel %vm718, %v720, %v716
          %v722 = vmul.f32 %v596, %v721
          %v723 = vrcp.pop %v636
          %v724 = vmul.f32 %v636, %v723
          %v725 = vsub.f32 1.0, %v724
          %v726 = vmul.f32 %v723, %v725
          %v727 = vadd.f32 %v723, %v726
          %vm728 = vweird.f32 %v636
          %vm729 = vweird.f32 %v723
          %vm730 = vmor %vm728, %vm729
          %v731 = vsel %vm730, %v723, %v727
          %v732 = vand.u32 2147483647, %v636
          %vm733 = vcmp.eq.f32.partialorder %v732, 8.507059e+37
          %v734 = vand.u32 %v636, 2147483648
          %v735 = vor.u32 1.1754944e-38, %v734
          %v736 = vsel %vm733, %v735, %v731
          %v737 = vmul.f32 %v597, %v736
          %v738 = vrcp.pop %v641
          %v739 = vmul.f32 %v641, %v738
          %v740 = vsub.f32 1.0, %v739
          %v741 = vmul.f32 %v738, %v740
          %v742 = vadd.f32 %v738, %v741
          %vm743 = vweird.f32 %v641
          %vm744 = vweird.f32 %v738
          %vm745 = vmor %vm743, %vm744
          %v746 = vsel %vm745, %v738, %v742
          %v747 = vand.u32 2147483647, %v641
          %vm748 = vcmp.eq.f32.partialorder %v747, 8.507059e+37
          %v749 = vand.u32 %v641, 2147483648
          %v750 = vor.u32 1.1754944e-38, %v749
          %v751 = vsel %vm748, %v750, %v746
          %v752 = vmul.f32 %v598, %v751
          %v753 = vrcp.pop %v646
          %v754 = vmul.f32 %v646, %v753
          %v755 = vsub.f32 1.0, %v754
          %v756 = vmul.f32 %v753, %v755
          %v757 = vadd.f32 %v753, %v756
          %vm758 = vweird.f32 %v646
          %vm759 = vweird.f32 %v753
          %vm760 = vmor %vm758, %vm759
          %v761 = vsel %vm760, %v753, %v757
          %v762 = vand.u32 2147483647, %v646
          %vm763 = vcmp.eq.f32.partialorder %v762, 8.507059e+37
          %v764 = vand.u32 %v646, 2147483648
          %v765 = vor.u32 1.1754944e-38, %v764
          %v766 = vsel %vm763, %v765, %v761
          %v767 = vmul.f32 %v599, %v766
          %v768 = vrcp.pop %v651
          %v769 = vmul.f32 %v651, %v768
          %v770 = vsub.f32 1.0, %v769
          %v771 = vmul.f32 %v768, %v770
          %v772 = vadd.f32 %v768, %v771
          %vm773 = vweird.f32 %v651
          %vm774 = vweird.f32 %v768
          %vm775 = vmor %vm773, %vm774
          %v776 = vsel %vm775, %v768, %v772
          %v777 = vand.u32 2147483647, %v651
          %vm778 = vcmp.eq.f32.partialorder %v777, 8.507059e+37
          %v779 = vand.u32 %v651, 2147483648
          %v780 = vor.u32 1.1754944e-38, %v779
          %v781 = vsel %vm778, %v780, %v776
          %v782 = vmul.f32 %v600, %v781
          %v783 = vrcp.pop %v656
          %v784 = vmul.f32 %v656, %v783
          %v785 = vsub.f32 1.0, %v784
          %v786 = vmul.f32 %v783, %v785
          %v787 = vadd.f32 %v783, %v786
          %vm788 = vweird.f32 %v656
          %vm789 = vweird.f32 %v783
          %vm790 = vmor %vm788, %vm789
          %v791 = vsel %vm790, %v783, %v787
          %v792 = vand.u32 2147483647, %v656
          %vm793 = vcmp.eq.f32.partialorder %v792, 8.507059e+37
          %v794 = vand.u32 %v656, 2147483648
          %v795 = vor.u32 1.1754944e-38, %v794
          %v796 = vsel %vm793, %v795, %v791
          %v797 = vmul.f32 %v601, %v796
          %v798 = vrcp.pop %v661
          %v799 = vmul.f32 %v661, %v798
          %v800 = vsub.f32 1.0, %v799
          %v801 = vmul.f32 %v798, %v800
          %v802 = vadd.f32 %v798, %v801
          %vm803 = vweird.f32 %v661
          %vm804 = vweird.f32 %v798
          %vm805 = vmor %vm803, %vm804
          %v806 = vsel %vm805, %v798, %v802
          %v807 = vand.u32 2147483647, %v661
          %vm808 = vcmp.eq.f32.partialorder %v807, 8.507059e+37
          %v809 = vand.u32 %v661, 2147483648
          %v810 = vor.u32 1.1754944e-38, %v809
          %v811 = vsel %vm808, %v810, %v806
          %v812 = vmul.f32 %v602, %v811
          %v813 = vrcp.pop %v666
          %v814 = vmul.f32 %v666, %v813
          %v815 = vsub.f32 1.0, %v814
          %v816 = vmul.f32 %v813, %v815
          %v817 = vadd.f32 %v813, %v816
          %vm818 = vweird.f32 %v666
          %vm819 = vweird.f32 %v813
          %vm820 = vmor %vm818, %vm819
          %v821 = vsel %vm820, %v813, %v817
          %v822 = vand.u32 2147483647, %v666
          %vm823 = vcmp.eq.f32.partialorder %v822, 8.507059e+37
          %v824 = vand.u32 %v666, 2147483648
          %v825 = vor.u32 1.1754944e-38, %v824
          %v826 = vsel %vm823, %v825, %v821
          %v827 = vmul.f32 %v603, %v826
          %v828 = vrcp.pop %v671
          %v829 = vmul.f32 %v671, %v828
          %v830 = vsub.f32 1.0, %v829
          %v831 = vmul.f32 %v828, %v830
          %v832 = vadd.f32 %v828, %v831
          %vm833 = vweird.f32 %v671
          %vm834 = vweird.f32 %v828
          %vm835 = vmor %vm833, %vm834
          %v836 = vsel %vm835, %v828, %v832
          %v837 = vand.u32 2147483647, %v671
          %vm838 = vcmp.eq.f32.partialorder %v837, 8.507059e+37
          %v839 = vand.u32 %v671, 2147483648
          %v840 = vor.u32 1.1754944e-38, %v839
          %v841 = vsel %vm838, %v840, %v836
          %v842 = vmul.f32 %v604, %v841
          %v843 = vrcp.pop %v676
          %v844 = vmul.f32 %v676, %v843
          %v845 = vsub.f32 1.0, %v844
          %v846 = vmul.f32 %v843, %v845
          %v847 = vadd.f32 %v843, %v846
          %vm848 = vweird.f32 %v676
          %vm849 = vweird.f32 %v843
          %vm850 = vmor %vm848, %vm849
          %v851 = vsel %vm850, %v843, %v847
          %v852 = vand.u32 2147483647, %v676
          %vm853 = vcmp.eq.f32.partialorder %v852, 8.507059e+37
          %v854 = vand.u32 %v676, 2147483648
          %v855 = vor.u32 1.1754944e-38, %v854
          %v856 = vsel %vm853, %v855, %v851
          %v857 = vmul.f32 %v605, %v856
          %v858 = vrcp.pop %v681
          %v859 = vmul.f32 %v681, %v858
          %v860 = vsub.f32 1.0, %v859
          %v861 = vmul.f32 %v858, %v860
          %v862 = vadd.f32 %v858, %v861
          %vm863 = vweird.f32 %v681
          %vm864 = vweird.f32 %v858
          %vm865 = vmor %vm863, %vm864
          %v866 = vsel %vm865, %v858, %v862
          %v867 = vand.u32 2147483647, %v681
          %vm868 = vcmp.eq.f32.partialorder %v867, 8.507059e+37
          %v869 = vand.u32 %v681, 2147483648
          %v870 = vor.u32 1.1754944e-38, %v869
          %v871 = vsel %vm868, %v870, %v866
          %v872 = vmul.f32 %v606, %v871
          %v873 = vrcp.pop %v686
          %v874 = vmul.f32 %v686, %v873
          %v875 = vsub.f32 1.0, %v874
          %v876 = vmul.f32 %v873, %v875
          %v877 = vadd.f32 %v873, %v876
          %vm878 = vweird.f32 %v686
          %vm879 = vweird.f32 %v873
          %vm880 = vmor %vm878, %vm879
          %v881 = vsel %vm880, %v873, %v877
          %v882 = vand.u32 2147483647, %v686
          %vm883 = vcmp.eq.f32.partialorder %v882, 8.507059e+37
          %v884 = vand.u32 %v686, 2147483648
          %v885 = vor.u32 1.1754944e-38, %v884
          %v886 = vsel %vm883, %v885, %v881
          %v887 = vmul.f32 %v607, %v886
          %v888 = vrcp.pop %v691
          %v889 = vmul.f32 %v691, %v888
          %v890 = vsub.f32 1.0, %v889
          %v891 = vmul.f32 %v888, %v890
          %v892 = vadd.f32 %v888, %v891
          %vm893 = vweird.f32 %v691
          %vm894 = vweird.f32 %v888
          %vm895 = vmor %vm893, %vm894
          %v896 = vsel %vm895, %v888, %v892
          %v897 = vand.u32 2147483647, %v691
          %vm898 = vcmp.eq.f32.partialorder %v897, 8.507059e+37
          %v899 = vand.u32 %v691, 2147483648
          %v900 = vor.u32 1.1754944e-38, %v899
          %v901 = vsel %vm898, %v900, %v896
          %v902 = vmul.f32 %v608, %v901
          %v903 = vrcp.pop %v696
          %v904 = vmul.f32 %v696, %v903
          %v905 = vsub.f32 1.0, %v904
          %v906 = vmul.f32 %v903, %v905
          %v907 = vadd.f32 %v903, %v906
          %vm908 = vweird.f32 %v696
          %vm909 = vweird.f32 %v903
          %vm910 = vmor %vm908, %vm909
          %v911 = vsel %vm910, %v903, %v907
          %v912 = vand.u32 2147483647, %v696
          %vm913 = vcmp.eq.f32.partialorder %v912, 8.507059e+37
          %v914 = vand.u32 %v696, 2147483648
          %v915 = vor.u32 1.1754944e-38, %v914
          %v916 = vsel %vm913, %v915, %v911
          %v917 = vmul.f32 %v609, %v916
          %v918 = vrcp.pop %v701
          %v919 = vmul.f32 %v701, %v918
          %v920 = vsub.f32 1.0, %v919
          %v921 = vmul.f32 %v918, %v920
          %v922 = vadd.f32 %v918, %v921
          %vm923 = vweird.f32 %v701
          %vm924 = vweird.f32 %v918
          %vm925 = vmor %vm923, %vm924
          %v926 = vsel %vm925, %v918, %v922
          %v927 = vand.u32 2147483647, %v701
          %vm928 = vcmp.eq.f32.partialorder %v927, 8.507059e+37
          %v929 = vand.u32 %v701, 2147483648
          %v930 = vor.u32 1.1754944e-38, %v929
          %v931 = vsel %vm928, %v930, %v926
          %v932 = vmul.f32 %v610, %v931
          %v933 = vrcp.pop %v706
          %v934 = vmul.f32 %v706, %v933
          %v935 = vsub.f32 1.0, %v934
          %v936 = vmul.f32 %v933, %v935
          %v937 = vadd.f32 %v933, %v936
          %vm938 = vweird.f32 %v706
          %vm939 = vweird.f32 %v933
          %vm940 = vmor %vm938, %vm939
          %v941 = vsel %vm940, %v933, %v937
          %v942 = vand.u32 2147483647, %v706
          %vm943 = vcmp.eq.f32.partialorder %v942, 8.507059e+37
          %v944 = vand.u32 %v706, 2147483648
          %v945 = vor.u32 1.1754944e-38, %v944
          %v946 = vsel %vm943, %v945, %v941
          %v947 = vmul.f32 %v611, %v946
          %v948 = vld [vmem:[%s2] sm:$0x1]
          %v950 = vperm.slane %v948, 0
          %v952 = vadd.f32 %v722, %v950
          %v953 = vadd.f32 %v737, %v950
          %v954 = vadd.f32 %v752, %v950
          %v955 = vadd.f32 %v767, %v950
          %v956 = vadd.f32 %v782, %v950
          %v957 = vadd.f32 %v797, %v950
          %v958 = vadd.f32 %v812, %v950
          %v959 = vadd.f32 %v827, %v950
          %v960 = vadd.f32 %v842, %v950
          %v961 = vadd.f32 %v857, %v950
          %v962 = vadd.f32 %v872, %v950
          %v963 = vadd.f32 %v887, %v950
          %v964 = vadd.f32 %v902, %v950
          %v965 = vadd.f32 %v917, %v950
          %v966 = vadd.f32 %v932, %v950
          %v967 = vadd.f32 %v947, %v950
          %vm968 = vcmp.eq.s32.totalorder %v400, 127
          %970 = vset.pattern.permute.xlu0 127
          %971 = vperm.xlu0 %970, %v596
          %v972 = vpop.permute.xlu0 %971
          %975 = vset.pattern.permute.xlu0 127
          %976 = vperm.xlu0 %975, %v597
          %v977 = vpop.permute.xlu0 %976
          %980 = vset.pattern.permute.xlu0 127
          %981 = vperm.xlu0 %980, %v598
          %v982 = vpop.permute.xlu0 %981
          %985 = vset.pattern.permute.xlu0 127
          %986 = vperm.xlu0 %985, %v599
          %v987 = vpop.permute.xlu0 %986
          %990 = vset.pattern.permute.xlu0 127
          %991 = vperm.xlu0 %990, %v600
          %v992 = vpop.permute.xlu0 %991
          %995 = vset.pattern.permute.xlu0 127
          %996 = vperm.xlu0 %995, %v601
          %v997 = vpop.permute.xlu0 %996
          %1000 = vset.pattern.permute.xlu0 127
          %1001 = vperm.xlu0 %1000, %v602
          %v1002 = vpop.permute.xlu0 %1001
          %1005 = vset.pattern.permute.xlu0 127
          %1006 = vperm.xlu0 %1005, %v603
          %v1007 = vpop.permute.xlu0 %1006
          %1010 = vset.pattern.permute.xlu0 127
          %1011 = vperm.xlu0 %1010, %v604
          %v1012 = vpop.permute.xlu0 %1011
          %1015 = vset.pattern.permute.xlu0 127
          %1016 = vperm.xlu0 %1015, %v605
          %v1017 = vpop.permute.xlu0 %1016
          %1020 = vset.pattern.permute.xlu0 127
          %1021 = vperm.xlu0 %1020, %v606
          %v1022 = vpop.permute.xlu0 %1021
          %1025 = vset.pattern.permute.xlu0 127
          %1026 = vperm.xlu0 %1025, %v607
          %v1027 = vpop.permute.xlu0 %1026
          %1030 = vset.pattern.permute.xlu0 127
          %1031 = vperm.xlu0 %1030, %v608
          %v1032 = vpop.permute.xlu0 %1031
          %1035 = vset.pattern.permute.xlu0 127
          %1036 = vperm.xlu0 %1035, %v609
          %v1037 = vpop.permute.xlu0 %1036
          %1040 = vset.pattern.permute.xlu0 127
          %1041 = vperm.xlu0 %1040, %v610
          %v1042 = vpop.permute.xlu0 %1041
          %1045 = vset.pattern.permute.xlu0 127
          %1046 = vperm.xlu0 %1045, %v611
          %v1047 = vpop.permute.xlu0 %1046
          %v1049 = vsel %vm968, %v972, %v952
          %v1050 = vsel %vm968, %v977, %v953
          %v1051 = vsel %vm968, %v982, %v954
          %v1052 = vsel %vm968, %v987, %v955
          %v1053 = vsel %vm968, %v992, %v956
          %v1054 = vsel %vm968, %v997, %v957
          %v1055 = vsel %vm968, %v1002, %v958
          %v1056 = vsel %vm968, %v1007, %v959
          %v1057 = vsel %vm968, %v1012, %v960
          %v1058 = vsel %vm968, %v1017, %v961
          %v1059 = vsel %vm968, %v1022, %v962
          %v1060 = vsel %vm968, %v1027, %v963
          %v1061 = vsel %vm968, %v1032, %v964
          %v1062 = vsel %vm968, %v1037, %v965
          %v1063 = vsel %vm968, %v1042, %v966
          %v1064 = vsel %vm968, %v1047, %v967
          %1065 = vst [vmem:[%s350] sm:$0xff] %v1049
          %1066 = vst [vmem:[%s350 + $0x8] sm:$0xff] %v1050
          %1067 = vst [vmem:[%s350 + $0x10] sm:$0xff] %v1051
          %1068 = vst [vmem:[%s350 + $0x18] sm:$0xff] %v1052
          %1069 = vst [vmem:[%s350 + $0x20] sm:$0xff] %v1053
          %1070 = vst [vmem:[%s350 + $0x28] sm:$0xff] %v1054
          %1071 = vst [vmem:[%s350 + $0x30] sm:$0xff] %v1055
          %1072 = vst [vmem:[%s350 + $0x38] sm:$0xff] %v1056
          %1073 = vst [vmem:[%s350 + $0x40] sm:$0xff] %v1057
          %1074 = vst [vmem:[%s350 + $0x48] sm:$0xff] %v1058
          %1075 = vst [vmem:[%s350 + $0x50] sm:$0xff] %v1059
          %1076 = vst [vmem:[%s350 + $0x58] sm:$0xff] %v1060
          %1077 = vst [vmem:[%s350 + $0x60] sm:$0xff] %v1061
          %1078 = vst [vmem:[%s350 + $0x68] sm:$0xff] %v1062
          %1079 = vst [vmem:[%s350 + $0x70] sm:$0xff] %v1063
          %1080 = vst [vmem:[%s350 + $0x78] sm:$0xff] %v1064
        $region92: #{allgnn_forward.3} parent=79 // pred_fallthru
          _
        %s1081 = sand.u32 %s104, 1
        %s1082 = sand.u32 %s104, 1
        %s1083 = smul.addr %s1082, 128
        %s1084 = scalar_lea.vmem [#allocation3], %s1083
        // Predicated region
        $region93: #{allgnn_forward.3} parent=79 // pred_check
          %p1085 = pneg %p114
        $region94: #{allgnn_forward.3} parent=79 // pred_check_branch
          %1087 = sbr.rel (%p1085) target = $region96
        $region95: #{allgnn_forward.3} parent=79 // pred_region
          %s1088 = smul.u32 16, %s18
          %s1089 = ssub.s32 38, %s1088
          %p1090 = scmp.lt.s32.totalorder %s1089, 16
          %s1091 = scalar_select %p1090, %s1089, 16
          %s1092 = smul.u32 8, %s1091
          %p1093 = scmp.ne.s32.totalorder 0, %s1092
          %s1094 = smul.addr %s1088, 8
          %s1095 = scalar_lea.vmem %s3, %s1094
          // Predicated region
          $region97: #{allgnn_forward.3} parent=95 // pred_check
            %p1096 = pneg %p1093
          $region98: #{allgnn_forward.3} parent=95 // pred_check_branch
            %1098 = sbr.rel (%p1096) target = $region100
          $region99: #{allgnn_forward.3} parent=95 // pred_region
            // Predicated region
            $region101: #{allgnn_forward.3} parent=99 // pred_check
              _
            $region102: #{allgnn_forward.3} parent=99 // pred_check_branch
              %1100 = sbr.rel (0) target = $region104
            $region103: #{allgnn_forward.3} parent=99 // pred_region
              // Predicated region
              $region123: #{allgnn_forward.3} parent=103 // pred_check
                _
              $region124: #{allgnn_forward.3} parent=103 // pred_check_branch
                %1180 = sbr.rel (0) target = $region126
              $region125: #{allgnn_forward.3} parent=103 // pred_region
                %s1181 = sshrl.u32 %s1091, 4
                // While loop
                $region127: #{allgnn_forward.3} parent=125 // loop_pre_header
                  _
                $region128: #{allgnn_forward.3} parent=125 // loop_header
                  %s1183 = sphi 0, %s1185
                  %p1184 = scmp.ge.s32.totalorder %s1183, %s1181
                  %s1188 = sphi 0, %s1225
                  %s1189 = sphi %s1084, %s1228
                  %s1190 = sphi %s1095, %s1229
                $region129: #{allgnn_forward.3} parent=125 // loop_header_branch
                  %1187 = sbr.rel (%p1184) target = $region133
                $region130: #{allgnn_forward.3} parent=125 // loop_body
                  %v1191 = vld [vmem:[%s1189] sm:$0xff]
                  %1192 = vst [vmem:[%s1190] sm:$0xff] %v1191
                  %v1193 = vld [vmem:[%s1189 + $0x8] sm:$0xff]
                  %1194 = vst [vmem:[%s1190 + $0x8] sm:$0xff] %v1193
                  %v1195 = vld [vmem:[%s1189 + $0x10] sm:$0xff]
                  %1196 = vst [vmem:[%s1190 + $0x10] sm:$0xff] %v1195
                  %v1197 = vld [vmem:[%s1189 + $0x18] sm:$0xff]
                  %1198 = vst [vmem:[%s1190 + $0x18] sm:$0xff] %v1197
                  %v1199 = vld [vmem:[%s1189 + $0x20] sm:$0xff]
                  %1200 = vst [vmem:[%s1190 + $0x20] sm:$0xff] %v1199
                  %v1201 = vld [vmem:[%s1189 + $0x28] sm:$0xff]
                  %1202 = vst [vmem:[%s1190 + $0x28] sm:$0xff] %v1201
                  %v1203 = vld [vmem:[%s1189 + $0x30] sm:$0xff]
                  %1204 = vst [vmem:[%s1190 + $0x30] sm:$0xff] %v1203
                  %v1205 = vld [vmem:[%s1189 + $0x38] sm:$0xff]
                  %1206 = vst [vmem:[%s1190 + $0x38] sm:$0xff] %v1205
                  %v1207 = vld [vmem:[%s1189 + $0x40] sm:$0xff]
                  %1208 = vst [vmem:[%s1190 + $0x40] sm:$0xff] %v1207
                  %v1209 = vld [vmem:[%s1189 + $0x48] sm:$0xff]
                  %1210 = vst [vmem:[%s1190 + $0x48] sm:$0xff] %v1209
                  %v1211 = vld [vmem:[%s1189 + $0x50] sm:$0xff]
                  %1212 = vst [vmem:[%s1190 + $0x50] sm:$0xff] %v1211
                  %v1213 = vld [vmem:[%s1189 + $0x58] sm:$0xff]
                  %1214 = vst [vmem:[%s1190 + $0x58] sm:$0xff] %v1213
                  %v1215 = vld [vmem:[%s1189 + $0x60] sm:$0xff]
                  %1216 = vst [vmem:[%s1190 + $0x60] sm:$0xff] %v1215
                  %v1217 = vld [vmem:[%s1189 + $0x68] sm:$0xff]
                  %1218 = vst [vmem:[%s1190 + $0x68] sm:$0xff] %v1217
                  %v1219 = vld [vmem:[%s1189 + $0x70] sm:$0xff]
                  %1220 = vst [vmem:[%s1190 + $0x70] sm:$0xff] %v1219
                  %v1221 = vld [vmem:[%s1189 + $0x78] sm:$0xff]
                  %1222 = vst [vmem:[%s1190 + $0x78] sm:$0xff] %v1221
                  %s1223 = sadd.s32 1, %s1188
                  %p1224 = scmp.ge.s32.totalorder %s1223, %s1181
                  %s1225 = scalar_select %p1224, 0, %s1223
                  %s1226 = smul.u32 %s1225, 128
                  %s1227 = smul.u32 %s1225, 128
                  %s1228 = scalar_lea.vmem %s1084, %s1226 [#allocation3]
                  %s1229 = scalar_lea.vmem %s1095, %s1227
                $region131: #{allgnn_forward.3} parent=125 // loop_footer
                  %s1185 = sadd.s32 %s1183, 1
                $region132: #{allgnn_forward.3} parent=125 // loop_footer_branch
                  %1182 = sbr.rel target = $region128
                $region133: #{allgnn_forward.3} parent=125 // loop_exit
                  _
                %s1230 = sshrl.u32 %s1091, 4
                %s1231 = sand.u32 %s1091, 15
                %s1232 = smul.u32 %s1230, 16
                %s1233 = smul.u32 8, %s1232
                %s1234 = scalar_lea.vmem %s1084, %s1233 [#allocation3]
                %s1235 = smul.u32 8, %s1232
                %s1236 = scalar_lea.vmem %s1095, %s1235
                // While loop
                $region134: #{allgnn_forward.3} parent=125 // loop_pre_header
                  _
                $region135: #{allgnn_forward.3} parent=125 // loop_header
                  %s1238 = sphi 0, %s1240
                  %p1239 = scmp.ge.s32.totalorder %s1238, %s1231
                  %s1243 = sphi 0, %s1250
                  %s1244 = sphi %s1234, %s1253
                  %s1245 = sphi %s1236, %s1254
                $region136: #{allgnn_forward.3} parent=125 // loop_header_branch
                  %1242 = sbr.rel (%p1239) target = $region140
                $region137: #{allgnn_forward.3} parent=125 // loop_body
                  %v1246 = vld [vmem:[%s1244] sm:$0xff]
                  %1247 = vst [vmem:[%s1245] sm:$0xff] %v1246
                  %s1248 = sadd.s32 1, %s1243
                  %p1249 = scmp.ge.s32.totalorder %s1248, %s1231
                  %s1250 = scalar_select %p1249, 0, %s1248
                  %s1251 = smul.u32 %s1250, 8
                  %s1252 = smul.u32 %s1250, 8
                  %s1253 = scalar_lea.vmem %s1234, %s1251 [#allocation3]
                  %s1254 = scalar_lea.vmem %s1236, %s1252
                $region138: #{allgnn_forward.3} parent=125 // loop_footer
                  %s1240 = sadd.s32 %s1238, 1
                $region139: #{allgnn_forward.3} parent=125 // loop_footer_branch
                  %1237 = sbr.rel target = $region135
                $region140: #{allgnn_forward.3} parent=125 // loop_exit
                  _
              $region126: #{allgnn_forward.3} parent=103 // pred_fallthru
                _
              // Predicated region
              $region141: #{allgnn_forward.3} parent=103 // pred_check
                _
              $region142: #{allgnn_forward.3} parent=103 // pred_check_branch
                %1256 = sbr.rel target = $region144
              $region143: #{allgnn_forward.3} parent=103 // pred_region
                _
              $region144: #{allgnn_forward.3} parent=103 // pred_fallthru
                _
            $region104: #{allgnn_forward.3} parent=99 // pred_fallthru
              _
            // Predicated region
            $region105: #{allgnn_forward.3} parent=99 // pred_check
              _
            $region106: #{allgnn_forward.3} parent=99 // pred_check_branch
              %1102 = sbr.rel target = $region108
            $region107: #{allgnn_forward.3} parent=99 // pred_region
              %s1104 = ssub.s32 256, 1
              %s1105 = sshrl.u32 %s1091, 4
              // While loop
              $region109: #{allgnn_forward.3} parent=107 // loop_pre_header
                _
              $region110: #{allgnn_forward.3} parent=107 // loop_header
                %s1107 = sphi 0, %s1109
                %p1108 = scmp.ge.s32.totalorder %s1107, %s1105
                %s1112 = sphi 0, %s1149
                %s1113 = sphi %s1084, %s1152
                %s1114 = sphi %s1095, %s1153
              $region111: #{allgnn_forward.3} parent=107 // loop_header_branch
                %1111 = sbr.rel (%p1108) target = $region115
              $region112: #{allgnn_forward.3} parent=107 // loop_body
                %v1115 = vld [vmem:[%s1113] sm:%s1104]
                %1116 = vst [vmem:[%s1114] sm:%s1104] %v1115
                %v1117 = vld [vmem:[%s1113 + $0x8] sm:%s1104]
                %1118 = vst [vmem:[%s1114 + $0x8] sm:%s1104] %v1117
                %v1119 = vld [vmem:[%s1113 + $0x10] sm:%s1104]
                %1120 = vst [vmem:[%s1114 + $0x10] sm:%s1104] %v1119
                %v1121 = vld [vmem:[%s1113 + $0x18] sm:%s1104]
                %1122 = vst [vmem:[%s1114 + $0x18] sm:%s1104] %v1121
                %v1123 = vld [vmem:[%s1113 + $0x20] sm:%s1104]
                %1124 = vst [vmem:[%s1114 + $0x20] sm:%s1104] %v1123
                %v1125 = vld [vmem:[%s1113 + $0x28] sm:%s1104]
                %1126 = vst [vmem:[%s1114 + $0x28] sm:%s1104] %v1125
                %v1127 = vld [vmem:[%s1113 + $0x30] sm:%s1104]
                %1128 = vst [vmem:[%s1114 + $0x30] sm:%s1104] %v1127
                %v1129 = vld [vmem:[%s1113 + $0x38] sm:%s1104]
                %1130 = vst [vmem:[%s1114 + $0x38] sm:%s1104] %v1129
                %v1131 = vld [vmem:[%s1113 + $0x40] sm:%s1104]
                %1132 = vst [vmem:[%s1114 + $0x40] sm:%s1104] %v1131
                %v1133 = vld [vmem:[%s1113 + $0x48] sm:%s1104]
                %1134 = vst [vmem:[%s1114 + $0x48] sm:%s1104] %v1133
                %v1135 = vld [vmem:[%s1113 + $0x50] sm:%s1104]
                %1136 = vst [vmem:[%s1114 + $0x50] sm:%s1104] %v1135
                %v1137 = vld [vmem:[%s1113 + $0x58] sm:%s1104]
                %1138 = vst [vmem:[%s1114 + $0x58] sm:%s1104] %v1137
                %v1139 = vld [vmem:[%s1113 + $0x60] sm:%s1104]
                %1140 = vst [vmem:[%s1114 + $0x60] sm:%s1104] %v1139
                %v1141 = vld [vmem:[%s1113 + $0x68] sm:%s1104]
                %1142 = vst [vmem:[%s1114 + $0x68] sm:%s1104] %v1141
                %v1143 = vld [vmem:[%s1113 + $0x70] sm:%s1104]
                %1144 = vst [vmem:[%s1114 + $0x70] sm:%s1104] %v1143
                %v1145 = vld [vmem:[%s1113 + $0x78] sm:%s1104]
                %1146 = vst [vmem:[%s1114 + $0x78] sm:%s1104] %v1145
                %s1147 = sadd.s32 1, %s1112
                %p1148 = scmp.ge.s32.totalorder %s1147, %s1105
                %s1149 = scalar_select %p1148, 0, %s1147
                %s1150 = smul.u32 %s1149, 128
                %s1151 = smul.u32 %s1149, 128
                %s1152 = scalar_lea.vmem %s1084, %s1150 [#allocation3]
                %s1153 = scalar_lea.vmem %s1095, %s1151
              $region113: #{allgnn_forward.3} parent=107 // loop_footer
                %s1109 = sadd.s32 %s1107, 1
              $region114: #{allgnn_forward.3} parent=107 // loop_footer_branch
                %1106 = sbr.rel target = $region110
              $region115: #{allgnn_forward.3} parent=107 // loop_exit
                _
              %s1154 = sshrl.u32 %s1091, 4
              %s1155 = sand.u32 %s1091, 15
              %s1156 = smul.u32 %s1154, 16
              %s1157 = smul.u32 8, %s1156
              %s1158 = scalar_lea.vmem %s1084, %s1157 [#allocation3]
              %s1159 = smul.u32 8, %s1156
              %s1160 = scalar_lea.vmem %s1095, %s1159
              // While loop
              $region116: #{allgnn_forward.3} parent=107 // loop_pre_header
                _
              $region117: #{allgnn_forward.3} parent=107 // loop_header
                %s1162 = sphi 0, %s1164
                %p1163 = scmp.ge.s32.totalorder %s1162, %s1155
                %s1167 = sphi 0, %s1174
                %s1168 = sphi %s1158, %s1177
                %s1169 = sphi %s1160, %s1178
              $region118: #{allgnn_forward.3} parent=107 // loop_header_branch
                %1166 = sbr.rel (%p1163) target = $region122
              $region119: #{allgnn_forward.3} parent=107 // loop_body
                %v1170 = vld [vmem:[%s1168] sm:%s1104]
                %1171 = vst [vmem:[%s1169] sm:%s1104] %v1170
                %s1172 = sadd.s32 1, %s1167
                %p1173 = scmp.ge.s32.totalorder %s1172, %s1155
                %s1174 = scalar_select %p1173, 0, %s1172
                %s1175 = smul.u32 %s1174, 8
                %s1176 = smul.u32 %s1174, 8
                %s1177 = scalar_lea.vmem %s1158, %s1175 [#allocation3]
                %s1178 = scalar_lea.vmem %s1160, %s1176
              $region120: #{allgnn_forward.3} parent=107 // loop_footer
                %s1164 = sadd.s32 %s1162, 1
              $region121: #{allgnn_forward.3} parent=107 // loop_footer_branch
                %1161 = sbr.rel target = $region117
              $region122: #{allgnn_forward.3} parent=107 // loop_exit
                _
            $region108: #{allgnn_forward.3} parent=99 // pred_fallthru
              _
          $region100: #{allgnn_forward.3} parent=95 // pred_fallthru
            _
          %1257 = vnop
        $region96: #{allgnn_forward.3} parent=79 // pred_fallthru
          _
      $region80: #{allgnn_forward.3} parent=5 // pred_fallthru
        _
      %p1258 = scmp.le.s32.totalorder 2, %s9
      // Predicated region
      $region145: #{allgnn_forward.3} parent=5 // pred_check
        %p1259 = pneg %p1258
      $region146: #{allgnn_forward.3} parent=5 // pred_check_branch
        %1261 = sbr.rel (%p1259) target = $region148
      $region147: #{allgnn_forward.3} parent=5 // pred_region
        %s1262 = ssub.s32 %s9, 2
        // Predicated region
        $region149: #{allgnn_forward.3} parent=147 // pred_check
          %p1263 = pneg %p120
        $region150: #{allgnn_forward.3} parent=147 // pred_check_branch
          %1265 = sbr.rel (%p1263) target = $region152
        $region151: #{allgnn_forward.3} parent=147 // pred_region
          %s1266 = sand.u32 %s105, 1
          %s1267 = sand.u32 %s105, 1
          %s1268 = smul.addr %s1267, 128
          %s1269 = scalar_lea.vmem [#allocation3], %s1268
        $region152: #{allgnn_forward.3} parent=147 // pred_fallthru
          _
      $region148: #{allgnn_forward.3} parent=5 // pred_fallthru
        _
    $region6: #{allgnn_forward.3} parent=1 // loop_footer
      %s13 = sadd.s32 1, %s9
    $region7: #{allgnn_forward.3} parent=1 // loop_footer_branch
      %8 = sbr.rel target = $region3
    $region8: #{allgnn_forward.3} parent=1 // loop_exit
      _

</llo_original>
